<compile_context>
chip_gen: v6e
topology: v6e:2x2x1
jax: 0.10.0
libtpu: 0.0.40
codegen_flags: <defaults>
</compile_context>

<pallas_src>
import functools
import math

import jax
import jax.numpy as jnp
from jax import lax
from jax.experimental import pallas as pl
from jax.experimental.pallas import tpu as pltpu

# ----------------------------- config -------------------------------------
DIM = 32          # config['dim']
HEAD_DIM = 16     # config['head_dim']
NUM_HEAD = 2      # config['num_head']
D_ATTN = NUM_HEAD * HEAD_DIM
HASHCODE_LEN = 8  # config['hashcode_len']


# ----------------------- in-kernel math helpers ----------------------------
def _int_pow(x, n):
    # square-and-multiply; for n=8 emits exactly 3 multiplies.
    acc = None
    base = x
    while n > 0:
        if n & 1:
            acc = base if acc is None else acc * base
        n >>= 1
        if n:
            base = base * base
    return jnp.ones_like(x) if acc is None else acc


# Abramowitz & Stegun 4.4.45 coefficients pre-scaled by 1/pi, so that
# poly(|x|) * sqrt(1-|x|) == acos(|x|)/pi   (|err| ~ 1e-8).
# Kept at 8 terms: a 4-6 term fit leaves ~1.5e-4 error after the ^8 power,
# which eats nearly the whole 2e-4 tolerance of the correctness check.
_ACOS_COEFFS_OVER_PI = tuple(c / math.pi for c in (
    1.5707963050, -0.2145988016, 0.0889789874, -0.0501743046,
    0.0308918810, -0.0170881256, 0.0066700901, -0.0012624911))


def _yoso_expectation(s, hashcode_len):
    """(1 - acos(clip(s,-1,1)) / pi) ** hashcode_len, with clip/abs/select fused."""
    ax = jnp.minimum(jnp.abs(s), 1.0)            # folds the clip into the |x| branch
    p = jnp.full_like(ax, _ACOS_COEFFS_OVER_PI[-1])
    for c in reversed(_ACOS_COEFFS_OVER_PI[:-1]):
        p = p * ax + c
    rp = p * jnp.sqrt(1.0 - ax)                  # == acos(|s|)/pi
    t = jnp.where(s < 0.0, rp, 1.0 - rp)         # == 1 - acos(s)/pi
    return _int_pow(t, hashcode_len)


# ------------------------------ kernel -------------------------------------
def attention_kernel(x_ref, mask_ref, wqkv_ref, bqkv_ref, wo_ref, bo_ref,
                     head_blk_ref, head_sel_ref, out_ref,
                     *, bt, seq_len, key_block):
    S = seq_len
    HB = NUM_HEAD * bt
    hiprec = lax.Precision.HIGHEST

    x3 = x_ref[...]                              # (bt, S, DIM)
    mk = mask_ref[...]                           # (bt, S, D_ATTN), lane-dense mask
    xf = x3.reshape(bt * S, DIM)                 # major-dim merge (layout-free)

    # ---- fused Q|K|V projection: one wide MXU matmul ----
    qkv = jnp.dot(xf, wqkv_ref[...], preferred_element_type=jnp.float32) + bqkv_ref[...]
    q = qkv[:, 0:D_ATTN]
    k = qkv[:, D_ATTN:2 * D_ATTN]
    v = qkv[:, 2 * D_ATTN:3 * D_ATTN]

    # ---- per-head L2 normalization without 16-lane slicing ----
    # block-diagonal ones matrix (constant input) broadcasts each head's
    # sum-of-squares back over that head's own lanes in one MXU matmul.
    head_blk = head_blk_ref[...]                 # (D_ATTN, D_ATTN)
    q_ssq = jnp.dot(q * q, head_blk, preferred_element_type=jnp.float32,
                    precision=hiprec)
    k_ssq = jnp.dot(k * k, head_blk, preferred_element_type=jnp.float32,
                    precision=hiprec)
    qn = q * (1.0 / (jnp.sqrt(q_ssq) + 1e-6))
    kn = k * (1.0 / (jnp.sqrt(k_ssq) + 1e-6))

    qn3 = qn.reshape(bt, S, D_ATTN)
    kn3 = kn.reshape(bt, S, D_ATTN)
    # key-side mask folded into V:  (w * kmask) @ V == w @ (V * kmask)
    v3 = v.reshape(bt, S, D_ATTN) * mk

    # ---- batched head chain: heads stacked onto the leading batch axis ----
    # zeroing the other head's lanes of qn makes the full-width contraction
    # equal to the per-head contraction; masking V the same way routes each
    # head's result to its own output lanes, so the head-sum is combine_heads.
    hm4 = head_sel_ref[...].reshape(NUM_HEAD, 1, 1, D_ATTN)      # (H,1,1,D)
    qn_hb = (qn3[None] * hm4).reshape(HB, S, D_ATTN)
    v_hb = (v3[None] * hm4).reshape(HB, S, D_ATTN)
    kn_hb = jnp.concatenate([kn3] * NUM_HEAD, axis=0)            # (HB, S, D)

    def kv_chunk(k_ch, v_ch):
        s = jnp.einsum("bqd,bkd->bqk", qn_hb, k_ch,
                       preferred_element_type=jnp.float32, precision=hiprec)
        w = _yoso_expectation(s, HASHCODE_LEN)
        return jnp.einsum("bqk,bkd->bqd", w, v_ch,
                          preferred_element_type=jnp.float32)

    n_kc = S // key_block
    if n_kc == 1:
        attn_hb = kv_chunk(kn_hb, v_hb)
    else:
        def body(c, acc):
            k0 = c * key_block
            k_ch = lax.dynamic_slice_in_dim(kn_hb, k0, key_block, axis=1)
            v_ch = lax.dynamic_slice_in_dim(v_hb, k0, key_block, axis=1)
            return acc + kv_chunk(k_ch, v_ch)
        attn_hb = lax.fori_loop(0, n_kc, body,
                                jnp.zeros((HB, S, D_ATTN), jnp.float32))

    # combine heads (sum over head axis) and apply the query-side mask
    attn3 = attn_hb.reshape(NUM_HEAD, bt, S, D_ATTN).sum(axis=0) * mk

    # ---- output projection (ff) ----
    attn = attn3.reshape(bt * S, D_ATTN)
    out = jnp.dot(attn, wo_ref[...], preferred_element_type=jnp.float32) + bo_ref[...]
    out_ref[...] = out.reshape(bt, S, DIM).astype(out_ref.dtype)


# ------------------------------ wrapper -------------------------------------
def _pick_tiles(B, S):
    """Pick (batch_tile, key_chunk).

    Budgets sized for the smallest generation (v7x: 64 MiB physical VMEM,
    32 MiB scoped): ~3 live f32 score temporaries of shape (NUM_HEAD*bt, S, kb)
    must fit in ~8 MiB, leaving room for double-buffered I/O blocks and the
    projection temporaries under the 32 MiB vmem_limit we request.
    """
    score_budget = 8 * 1024 * 1024
    per_copy = score_budget // 3

    # key-chunk: near the ~512 sweet spot, a divisor of S, small enough that
    # the score tile stays under budget even at bt = 1.
    kb_cap = max(8, per_copy // max(NUM_HEAD * S * 4, 1))
    kb_cap = min(kb_cap, 512, S)
    kb = 1
    for c in range(kb_cap, 0, -1):
        if S % c == 0:
            kb = c
            break

    # batch tile: (a) >=2 grid steps when B >= 2 (v7x megacore split),
    # (b) <= 1024 rows per step, (c) score temporaries under budget,
    # (d) bt divides B.
    max_rows = max(1, 1024 // max(S, 1))
    max_score = max(1, per_copy // max(NUM_HEAD * S * kb * 4, 1))
    bt = max(1, min(B, max_rows, max_score, max(1, B // 2)))
    while B % bt:
        bt -= 1
    return bt, kb


def yoso_attention_forward(x, mask, params):
    B, S, D = x.shape
    assert D == DIM
    # host-side QKV fusion: one (D, 3*D_ATTN) RHS instead of three narrow ones
    wqkv = jnp.concatenate([params["wq"], params["wk"], params["wv"]], axis=1)
    bqkv = jnp.concatenate([params["bq"], params["bk"], params["bv"]], axis=1)
    wo, bo = params["wo"], params["bo"]

    # lane-dense mask (B, S, D_ATTN): no 1-lane padded loads / in-kernel broadcasts
    mask3 = jnp.broadcast_to(mask.astype(jnp.float32)[:, :, None], (B, S, D_ATTN))

    # constant head-structure matrices built host-side (not rebuilt per step)
    fi = jnp.arange(D_ATTN)[:, None] // HEAD_DIM
    fj = jnp.arange(D_ATTN)[None, :] // HEAD_DIM
    head_blk = (fi == fj).astype(jnp.float32)                       # (D_ATTN, D_ATTN)
    head_sel = (jnp.arange(NUM_HEAD)[:, None]
                == (jnp.arange(D_ATTN)[None, :] // HEAD_DIM)).astype(jnp.float32)

    bt, kb = _pick_tiles(B, S)
    grid = (B // bt,)

    def const_spec(arr):
        r = arr.ndim
        return pl.BlockSpec(arr.shape, lambda b, r=r: (0,) * r)

    kernel = functools.partial(attention_kernel, bt=bt, seq_len=S, key_block=kb)
    return pl.pallas_call(
        kernel,
        out_shape=jax.ShapeDtypeStruct((B, S, D), jnp.float32),
        grid=grid,
        in_specs=[pl.BlockSpec((bt, S, D), lambda b: (b, 0, 0)),
                  pl.BlockSpec((bt, S, D_ATTN), lambda b: (b, 0, 0)),
                  const_spec(wqkv), const_spec(bqkv),
                  const_spec(wo), const_spec(bo),
                  const_spec(head_blk), const_spec(head_sel)],
        out_specs=pl.BlockSpec((bt, S, D), lambda b: (b, 0, 0)),
        compiler_params=pltpu.CompilerParams(
            dimension_semantics=("parallel",),    # batch blocks are independent
            vmem_limit_bytes=32 * 1024 * 1024),
    )(x, mask3, wqkv, bqkv, wo, bo, head_blk, head_sel)


# --------------------------- param init & reference -------------------------
def init_params(key):
    def lin(k, din, dout, scale=0.05):
        kw, kb = jax.random.split(k)
        return (jax.random.normal(kw, (din, dout), jnp.float32) * scale,
                jax.random.normal(kb, (1, dout), jnp.float32) * scale)

    kq, kk, kv, ko = jax.random.split(key, 4)
    p = {}
    p["wq"], p["bq"] = lin(kq, DIM, D_ATTN)
    p["wk"], p["bk"] = lin(kk, DIM, D_ATTN)
    p["wv"], p["bv"] = lin(kv, DIM, D_ATTN)
    p["wo"], p["bo"] = lin(ko, D_ATTN, DIM)
    return p


def reference(x, mask, p):
    B, S, _ = x.shape
    q = x @ p["wq"] + p["bq"]
    k = x @ p["wk"] + p["bk"]
    v = x @ p["wv"] + p["bv"]

    def split(t):
        return t.reshape(B, S, NUM_HEAD, HEAD_DIM).transpose(0, 2, 1, 3)

    Q, K, V = split(q), split(k), split(v)
    Qn = Q / (jnp.sqrt((Q ** 2).sum(-1, keepdims=True)) + 1e-6)
    Kn = K / (jnp.sqrt((K ** 2).sum(-1, keepdims=True)) + 1e-6)
    s = jnp.clip(jnp.einsum("bhsd,bhtd->bhst", Qn, Kn), -1.0, 1.0)
    w = (1.0 - jnp.arccos(s) / math.pi) ** HASHCODE_LEN
    w = w * mask[:, None, :, None] * mask[:, None, None, :]
    o = jnp.einsum("bhst,bhtd->bhsd", w, V)
    o = o.transpose(0, 2, 1, 3).reshape(B, S, D_ATTN)
    return o @ p["wo"] + p["bo"]


# ------------------------------ main ----------------------------------------
if __name__ == "__main__":
    key = jax.random.PRNGKey(0)
    kx, kp = jax.random.split(key)
    B, S = 2, 8
    x = jax.random.normal(kx, (B, S, DIM), jnp.float32)
    mask = jnp.ones((B, S), jnp.float32).at[1, 6:].set(0.0)  # pad last 2 tokens of batch 1
    params = init_params(kp)

    out = yoso_attention_forward(x, mask, params)
    out = jax.block_until_ready(out)

    ref = reference(x, mask, params)
    assert out.shape == (B, S, DIM)
    max_err = float(jnp.max(jnp.abs(out - ref)))
    assert jnp.allclose(out, ref, atol=2e-4, rtol=2e-4), f"max_err={max_err}"
    print("KERNEL_OK")
</pallas_src>

<mosaic_0001>
module attributes {stable_mosaic.version = 11 : i64} {
  func.func @attention_kernel(%arg0: i32, %arg1: memref<1x8x32xf32, #tpu.memory_space<vmem>>, %arg2: memref<1x8x32xf32, #tpu.memory_space<vmem>>, %arg3: memref<32x96xf32, #tpu.memory_space<vmem>>, %arg4: memref<1x96xf32, #tpu.memory_space<vmem>>, %arg5: memref<32x32xf32, #tpu.memory_space<vmem>>, %arg6: memref<1x32xf32, #tpu.memory_space<vmem>>, %arg7: memref<32x32xf32, #tpu.memory_space<vmem>>, %arg8: memref<2x32xf32, #tpu.memory_space<vmem>>, %arg9: memref<1x8x32xf32, #tpu.memory_space<vmem>>) attributes {dimension_semantics = [#tpu.dimension_semantics<parallel>], iteration_bounds = array<i64: 2>, scalar_prefetch = 0 : i64, scratch_operands = 0 : i64, tpu.core_type = #tpu.core_type<tc>, window_params = [{transform_indices = @transform_0, window_bounds = array<i64: 1, 8, 32>}, {transform_indices = @transform_1, window_bounds = array<i64: 1, 8, 32>}, {pipeline_mode = #tpu.pipeline_mode<synchronous>, transform_indices = @transform_2, window_bounds = array<i64: 32, 96>}, {pipeline_mode = #tpu.pipeline_mode<synchronous>, transform_indices = @transform_3, window_bounds = array<i64: 1, 96>}, {pipeline_mode = #tpu.pipeline_mode<synchronous>, transform_indices = @transform_4, window_bounds = array<i64: 32, 32>}, {pipeline_mode = #tpu.pipeline_mode<synchronous>, transform_indices = @transform_5, window_bounds = array<i64: 1, 32>}, {pipeline_mode = #tpu.pipeline_mode<synchronous>, transform_indices = @transform_6, window_bounds = array<i64: 32, 32>}, {pipeline_mode = #tpu.pipeline_mode<synchronous>, transform_indices = @transform_7, window_bounds = array<i64: 2, 32>}, {transform_indices = @transform_8, window_bounds = array<i64: 1, 8, 32>}]} {
    %c0 = arith.constant 0 : index
    %c0_0 = arith.constant 0 : index
    %c0_1 = arith.constant 0 : index
    %0 = vector.load %arg1[%c0, %c0_0, %c0_1] : memref<1x8x32xf32, #tpu.memory_space<vmem>>, vector<1x8x32xf32>
    %c0_2 = arith.constant 0 : index
    %c0_3 = arith.constant 0 : index
    %c0_4 = arith.constant 0 : index
    %1 = vector.load %arg2[%c0_2, %c0_3, %c0_4] : memref<1x8x32xf32, #tpu.memory_space<vmem>>, vector<1x8x32xf32>
    %2 = vector.shape_cast %0 : vector<1x8x32xf32> to vector<8x32xf32>
    %c0_5 = arith.constant 0 : index
    %c0_6 = arith.constant 0 : index
    %3 = vector.load %arg3[%c0_5, %c0_6] : memref<32x96xf32, #tpu.memory_space<vmem>>, vector<32x96xf32>
    %cst = arith.constant dense<0.000000e+00> : vector<8x96xf32>
    %4 = tpu.matmul %2, %3, %cst {dimension_numbers = #tpu.dot_dimension_numbers<[1], [0], [0], [1], [0, 0, 1, 1], [], []>} : vector<8x32xf32>, vector<32x96xf32>, vector<8x96xf32> -> vector<8x96xf32>
    %c0_7 = arith.constant 0 : index
    %c0_8 = arith.constant 0 : index
    %5 = vector.load %arg4[%c0_7, %c0_8] : memref<1x96xf32, #tpu.memory_space<vmem>>, vector<1x96xf32>
    %6 = vector.broadcast %5 : vector<1x96xf32> to vector<8x96xf32>
    %7 = arith.addf %4, %6 : vector<8x96xf32>
    %8 = vector.extract_strided_slice %7 {offsets = [0, 0], sizes = [8, 32], strides = [1, 1]} : vector<8x96xf32> to vector<8x32xf32>
    %9 = vector.extract_strided_slice %7 {offsets = [0, 32], sizes = [8, 32], strides = [1, 1]} : vector<8x96xf32> to vector<8x32xf32>
    %10 = vector.extract_strided_slice %7 {offsets = [0, 64], sizes = [8, 32], strides = [1, 1]} : vector<8x96xf32> to vector<8x32xf32>
    %c0_9 = arith.constant 0 : index
    %c0_10 = arith.constant 0 : index
    %11 = vector.load %arg7[%c0_9, %c0_10] : memref<32x32xf32, #tpu.memory_space<vmem>>, vector<32x32xf32>
    %12 = arith.mulf %8, %8 : vector<8x32xf32>
    %cst_11 = arith.constant dense<0.000000e+00> : vector<8x32xf32>
    %13 = tpu.matmul %12, %11, %cst_11 {dimension_numbers = #tpu.dot_dimension_numbers<[1], [0], [0], [1], [0, 0, 1, 1], [], []>, precision = #tpu.contract_precision<fp32>} : vector<8x32xf32>, vector<32x32xf32>, vector<8x32xf32> -> vector<8x32xf32>
    %14 = arith.mulf %9, %9 : vector<8x32xf32>
    %cst_12 = arith.constant dense<0.000000e+00> : vector<8x32xf32>
    %15 = tpu.matmul %14, %11, %cst_12 {dimension_numbers = #tpu.dot_dimension_numbers<[1], [0], [0], [1], [0, 0, 1, 1], [], []>, precision = #tpu.contract_precision<fp32>} : vector<8x32xf32>, vector<32x32xf32>, vector<8x32xf32> -> vector<8x32xf32>
    %16 = math.sqrt %13 : vector<8x32xf32>
    %cst_13 = arith.constant 9.99999997E-7 : f32
    %17 = vector.broadcast %cst_13 : f32 to vector<8x32xf32>
    %18 = arith.addf %16, %17 : vector<8x32xf32>
    %cst_14 = arith.constant 1.000000e+00 : f32
    %19 = vector.broadcast %cst_14 : f32 to vector<8x32xf32>
    %20 = arith.divf %19, %18 : vector<8x32xf32>
    %21 = arith.mulf %8, %20 : vector<8x32xf32>
    %22 = math.sqrt %15 : vector<8x32xf32>
    %cst_15 = arith.constant 9.99999997E-7 : f32
    %23 = vector.broadcast %cst_15 : f32 to vector<8x32xf32>
    %24 = arith.addf %22, %23 : vector<8x32xf32>
    %cst_16 = arith.constant 1.000000e+00 : f32
    %25 = vector.broadcast %cst_16 : f32 to vector<8x32xf32>
    %26 = arith.divf %25, %24 : vector<8x32xf32>
    %27 = arith.mulf %9, %26 : vector<8x32xf32>
    %28 = vector.shape_cast %21 : vector<8x32xf32> to vector<1x8x32xf32>
    %29 = vector.shape_cast %27 : vector<8x32xf32> to vector<1x8x32xf32>
    %30 = vector.shape_cast %10 : vector<8x32xf32> to vector<1x8x32xf32>
    %31 = arith.mulf %30, %1 : vector<1x8x32xf32>
    %c0_17 = arith.constant 0 : index
    %c0_18 = arith.constant 0 : index
    %32 = vector.load %arg8[%c0_17, %c0_18] : memref<2x32xf32, #tpu.memory_space<vmem>>, vector<2x32xf32>
    %33 = vector.shape_cast %32 : vector<2x32xf32> to vector<2x1x1x32xf32>
    %34 = vector.shape_cast %28 : vector<1x8x32xf32> to vector<1x1x8x32xf32>
    %35 = vector.broadcast %34 : vector<1x1x8x32xf32> to vector<2x1x8x32xf32>
    %36 = vector.broadcast %33 : vector<2x1x1x32xf32> to vector<2x1x8x32xf32>
    %37 = arith.mulf %35, %36 : vector<2x1x8x32xf32>
    %38 = vector.shape_cast %37 : vector<2x1x8x32xf32> to vector<2x8x32xf32>
    %39 = vector.shape_cast %31 : vector<1x8x32xf32> to vector<1x1x8x32xf32>
    %40 = vector.broadcast %39 : vector<1x1x8x32xf32> to vector<2x1x8x32xf32>
    %41 = vector.broadcast %33 : vector<2x1x1x32xf32> to vector<2x1x8x32xf32>
    %42 = arith.mulf %40, %41 : vector<2x1x8x32xf32>
    %43 = vector.shape_cast %42 : vector<2x1x8x32xf32> to vector<2x8x32xf32>
    %44 = tpu.concatenate %29, %29 in 0 : vector<1x8x32xf32>, vector<1x8x32xf32> -> vector<2x8x32xf32>
    "tpu.trace_start"() <{level = 10 : i32, message = "bqd,bkd->bqk"}> : () -> ()
    %cst_19 = arith.constant dense<0.000000e+00> : vector<2x8x8xf32>
    %45 = tpu.matmul %38, %44, %cst_19 {dimension_numbers = #tpu.dot_dimension_numbers<[2], [2], [1], [1], [0, 0, 0, 1, 1, 1], [0], [0]>, precision = #tpu.contract_precision<fp32>} : vector<2x8x32xf32>, vector<2x8x32xf32>, vector<2x8x8xf32> -> vector<2x8x8xf32>
    "tpu.trace_stop"() : () -> ()
    %46 = math.absf %45 : vector<2x8x8xf32>
    %cst_20 = arith.constant 1.000000e+00 : f32
    %47 = vector.broadcast %cst_20 : f32 to vector<2x8x8xf32>
    %48 = arith.minimumf %46, %47 : vector<2x8x8xf32>
    %cst_21 = arith.constant -4.01863392E-4 : f32
    %49 = vector.broadcast %cst_21 : f32 to vector<2x8x8xf32>
    %50 = arith.mulf %49, %48 : vector<2x8x8xf32>
    %cst_22 = arith.constant 0.00212315563 : f32
    %51 = vector.broadcast %cst_22 : f32 to vector<2x8x8xf32>
    %52 = arith.addf %50, %51 : vector<2x8x8xf32>
    %53 = arith.mulf %52, %48 : vector<2x8x8xf32>
    %cst_23 = arith.constant -0.00543931918 : f32
    %54 = vector.broadcast %cst_23 : f32 to vector<2x8x8xf32>
    %55 = arith.addf %53, %54 : vector<2x8x8xf32>
    %56 = arith.mulf %55, %48 : vector<2x8x8xf32>
    %cst_24 = arith.constant 0.00983319152 : f32
    %57 = vector.broadcast %cst_24 : f32 to vector<2x8x8xf32>
    %58 = arith.addf %56, %57 : vector<2x8x8xf32>
    %59 = arith.mulf %58, %48 : vector<2x8x8xf32>
    %cst_25 = arith.constant -0.015970977 : f32
    %60 = vector.broadcast %cst_25 : f32 to vector<2x8x8xf32>
    %61 = arith.addf %59, %60 : vector<2x8x8xf32>
    %62 = arith.mulf %61, %48 : vector<2x8x8xf32>
    %cst_26 = arith.constant 0.0283228923 : f32
    %63 = vector.broadcast %cst_26 : f32 to vector<2x8x8xf32>
    %64 = arith.addf %62, %63 : vector<2x8x8xf32>
    %65 = arith.mulf %64, %48 : vector<2x8x8xf32>
    %cst_27 = arith.constant -0.0683089196 : f32
    %66 = vector.broadcast %cst_27 : f32 to vector<2x8x8xf32>
    %67 = arith.addf %65, %66 : vector<2x8x8xf32>
    %68 = arith.mulf %67, %48 : vector<2x8x8xf32>
    %cst_28 = arith.constant 5.000000e-01 : f32
    %69 = vector.broadcast %cst_28 : f32 to vector<2x8x8xf32>
    %70 = arith.addf %68, %69 : vector<2x8x8xf32>
    %cst_29 = arith.constant 1.000000e+00 : f32
    %71 = vector.broadcast %cst_29 : f32 to vector<2x8x8xf32>
    %72 = arith.subf %71, %48 : vector<2x8x8xf32>
    %73 = math.sqrt %72 : vector<2x8x8xf32>
    %74 = arith.mulf %70, %73 : vector<2x8x8xf32>
    %cst_30 = arith.constant 0.000000e+00 : f32
    %75 = vector.broadcast %cst_30 : f32 to vector<2x8x8xf32>
    %76 = arith.cmpf olt, %45, %75 : vector<2x8x8xf32>
    %cst_31 = arith.constant 1.000000e+00 : f32
    %77 = vector.broadcast %cst_31 : f32 to vector<2x8x8xf32>
    %78 = arith.subf %77, %74 : vector<2x8x8xf32>
    %79 = arith.select %76, %74, %78 : vector<2x8x8xi1>, vector<2x8x8xf32>
    %80 = arith.mulf %79, %79 : vector<2x8x8xf32>
    %81 = arith.mulf %80, %80 : vector<2x8x8xf32>
    %82 = arith.mulf %81, %81 : vector<2x8x8xf32>
    "tpu.trace_start"() <{level = 10 : i32, message = "bqk,bkd->bqd"}> : () -> ()
    %cst_32 = arith.constant dense<0.000000e+00> : vector<2x8x32xf32>
    %83 = tpu.matmul %82, %43, %cst_32 {dimension_numbers = #tpu.dot_dimension_numbers<[2], [1], [1], [2], [0, 0, 0, 1, 1, 2], [0], [0]>} : vector<2x8x8xf32>, vector<2x8x32xf32>, vector<2x8x32xf32> -> vector<2x8x32xf32>
    "tpu.trace_stop"() : () -> ()
    %84 = vector.shape_cast %83 : vector<2x8x32xf32> to vector<2x1x8x32xf32>
    %cst_33 = arith.constant dense<0.000000e+00> : vector<1x8x32xf32>
    %85 = vector.multi_reduction <add>, %84, %cst_33 [0] : vector<2x1x8x32xf32> to vector<1x8x32xf32>
    %86 = arith.mulf %85, %1 : vector<1x8x32xf32>
    %87 = vector.shape_cast %86 : vector<1x8x32xf32> to vector<8x32xf32>
    %c0_34 = arith.constant 0 : index
    %c0_35 = arith.constant 0 : index
    %88 = vector.load %arg5[%c0_34, %c0_35] : memref<32x32xf32, #tpu.memory_space<vmem>>, vector<32x32xf32>
    %cst_36 = arith.constant dense<0.000000e+00> : vector<8x32xf32>
    %89 = tpu.matmul %87, %88, %cst_36 {dimension_numbers = #tpu.dot_dimension_numbers<[1], [0], [0], [1], [0, 0, 1, 1], [], []>} : vector<8x32xf32>, vector<32x32xf32>, vector<8x32xf32> -> vector<8x32xf32>
    %c0_37 = arith.constant 0 : index
    %c0_38 = arith.constant 0 : index
    %90 = vector.load %arg6[%c0_37, %c0_38] : memref<1x32xf32, #tpu.memory_space<vmem>>, vector<1x32xf32>
    %91 = vector.broadcast %90 : vector<1x32xf32> to vector<8x32xf32>
    %92 = arith.addf %89, %91 : vector<8x32xf32>
    %93 = vector.shape_cast %92 : vector<8x32xf32> to vector<1x8x32xf32>
    %c0_39 = arith.constant 0 : index
    %c0_40 = arith.constant 0 : index
    %c0_41 = arith.constant 0 : index
    %94 = vector.load %arg9[%c0_39, %c0_40, %c0_41] : memref<1x8x32xf32, #tpu.memory_space<vmem>>, vector<1x8x32xf32>
    tpu.vector_store %arg9[%c0_39, %c0_40, %c0_41], %93 {strides = array<i32>} : memref<1x8x32xf32, #tpu.memory_space<vmem>>, vector<1x8x32xf32>,
    return
  }
  func.func @transform_0(%arg0: i32) -> (i32, i32, i32) {
    %c0_i32 = arith.constant 0 : i32
    %c0_i32_0 = arith.constant 0 : i32
    %c0_i32_1 = arith.constant 0 : i32
    return %arg0, %c0_i32, %c0_i32_0 : i32, i32, i32
  }
  func.func @transform_1(%arg0: i32) -> (i32, i32, i32) {
    %c0_i32 = arith.constant 0 : i32
    %c0_i32_0 = arith.constant 0 : i32
    %c0_i32_1 = arith.constant 0 : i32
    return %arg0, %c0_i32, %c0_i32_0 : i32, i32, i32
  }
  func.func @transform_2(%arg0: i32) -> (i32, i32) {
    %c0_i32 = arith.constant 0 : i32
    %c0_i32_0 = arith.constant 0 : i32
    %c0_i32_1 = arith.constant 0 : i32
    return %c0_i32, %c0_i32_0 : i32, i32
  }
  func.func @transform_3(%arg0: i32) -> (i32, i32) {
    %c0_i32 = arith.constant 0 : i32
    %c0_i32_0 = arith.constant 0 : i32
    %c0_i32_1 = arith.constant 0 : i32
    return %c0_i32, %c0_i32_0 : i32, i32
  }
  func.func @transform_4(%arg0: i32) -> (i32, i32) {
    %c0_i32 = arith.constant 0 : i32
    %c0_i32_0 = arith.constant 0 : i32
    %c0_i32_1 = arith.constant 0 : i32
    return %c0_i32, %c0_i32_0 : i32, i32
  }
  func.func @transform_5(%arg0: i32) -> (i32, i32) {
    %c0_i32 = arith.constant 0 : i32
    %c0_i32_0 = arith.constant 0 : i32
    %c0_i32_1 = arith.constant 0 : i32
    return %c0_i32, %c0_i32_0 : i32, i32
  }
  func.func @transform_6(%arg0: i32) -> (i32, i32) {
    %c0_i32 = arith.constant 0 : i32
    %c0_i32_0 = arith.constant 0 : i32
    %c0_i32_1 = arith.constant 0 : i32
    return %c0_i32, %c0_i32_0 : i32, i32
  }
  func.func @transform_7(%arg0: i32) -> (i32, i32) {
    %c0_i32 = arith.constant 0 : i32
    %c0_i32_0 = arith.constant 0 : i32
    %c0_i32_1 = arith.constant 0 : i32
    return %c0_i32, %c0_i32_0 : i32, i32
  }
  func.func @transform_8(%arg0: i32) -> (i32, i32, i32) {
    %c0_i32 = arith.constant 0 : i32
    %c0_i32_0 = arith.constant 0 : i32
    %c0_i32_1 = arith.constant 0 : i32
    return %arg0, %c0_i32, %c0_i32_0 : i32, i32, i32
  }
}

</mosaic_0001>

<llo_original>
// kernel: tpu_custom_call.1
$region0: #{tpu_custom_call.1}
  #allocation0 [shape = 'u32[]', space=smem, size = 0x4, offset = 0x4, fixed_abs, tag = 'smem constant byte address 0x4 - core index']
  #allocation1 [shape = 'u32[144,128]{1,0:T(1,128)}', space=vmem, size = 0x12000, scoped, tag = 'internal scratch']
  %s0 = inlined_call_operand.hbm [shape: f32[2,8,32], index: 0, kind: input, shape index: {}]
  %s1 = inlined_call_operand.hbm [shape: f32[2,8,32], index: 1, kind: input, shape index: {}]
  %s2 = inlined_call_operand.hbm [shape: f32[32,96], index: 2, kind: input, shape index: {}]
  %s3 = inlined_call_operand.vmem [shape: f32[1,96], index: 3, kind: input, shape index: {}]
  %s4 = inlined_call_operand.hbm [shape: f32[32,32], index: 4, kind: input, shape index: {}]
  %s5 = inlined_call_operand.vmem [shape: f32[1,32], index: 5, kind: input, shape index: {}]
  %s6 = inlined_call_operand.hbm [shape: f32[32,32], index: 6, kind: input, shape index: {}]
  %s7 = inlined_call_operand.vmem [shape: f32[2,32], index: 7, kind: input, shape index: {}]
  %s8 = inlined_call_operand.hbm [shape: f32[2,8,32], index: 8, kind: output, shape index: {}]
  %s9 = sld [smem:[#allocation0]]
  $region85: #{tpu_custom_call.1} parent=0
    _
  %s11 = ssub.s32 1, %s9
  %s12 = scalar_select 0, %s11, %s9
  $region1: #{tpu_custom_call.1} parent=0
    #allocation2 [shape = 'u8[8192]{0}', space=vmem, size = 0x2000, scoped, tag = 'input window, operand 0']
    #allocation3 [shape = 's32[2]{0}', space=sflag, size = 0x8, scoped, tag = 'scoped memory for tpu_custom_call.1']
    #allocation4 [shape = 's32[2]{0}', space=sflag, size = 0x8, scoped, tag = 'scoped memory for tpu_custom_call.1']
    #allocation5 [shape = 'u8[8192]{0}', space=vmem, size = 0x2000, scoped, tag = 'input window, operand 1']
    #allocation6 [shape = 's32[2]{0}', space=sflag, size = 0x8, scoped, tag = 'scoped memory for tpu_custom_call.1']
    #allocation7 [shape = 'u8[16384]{0}', space=vmem, size = 0x4000, scoped, tag = 'input window, operand 2, single buffered']
    #allocation8 [shape = 'u8[16384]{0}', space=vmem, size = 0x4000, scoped, tag = 'input window, operand 4, single buffered']
    #allocation9 [shape = 's32[1]{0}', space=sflag, size = 0x4, scoped, tag = 'scoped memory for tpu_custom_call.1']
    #allocation10 [shape = 'u8[16384]{0}', space=vmem, size = 0x4000, scoped, tag = 'input window, operand 6, single buffered']
    #allocation11 [shape = 'u8[8192]{0}', space=vmem, size = 0x2000, scoped, tag = 'output window, operand 0']
    %13 = vsyncpa [#allocation3], 0
    %s14 = scalar_lea.sflag [#allocation3], 1
    %15 = vsyncpa %s14, 0
    %16 = vsyncpa [#allocation6], 0
    %s17 = scalar_lea.sflag [#allocation6], 1
    %18 = vsyncpa %s17, 0
    %19 = vsyncpa [#allocation9], 0
    %20 = vsyncpa [#allocation4], 0
    %s21 = scalar_lea.sflag [#allocation4], 1
    %22 = vsyncpa %s21, 0
    loop: start=0, step=1, limit=4
    $region2: #{tpu_custom_call.1} parent=1 // loop_pre_header
      _
    $region3: #{tpu_custom_call.1} parent=1 // loop_header
      %s24 = sphi 0, %s28
      %p25 = scmp.ge.s32.totalorder %s24, 4
      %s34 = sphi 0, %s36
      %s37 = sphi 0, %s34
      %s38 = sphi 0, %s37
      %s54 = sphi 0, %s38
      %s60 = sphi 0, %s62
      %s63 = sphi 0, %s60
      %s64 = sphi 0, %s63
      %s80 = sphi 0, %s64
      %s84 = sphi 0, %s84
      %s86 = sphi 0, %s84
      %s87 = sphi 0, %s86
      %s101 = sphi 0, %s87
      %s105 = sphi 0, %s105
      %s107 = sphi 0, %s105
      %s108 = sphi 0, %s107
      %s122 = sphi 0, %s108
      %s126 = sphi 0, %s126
      %s128 = sphi 0, %s126
      %s129 = sphi 0, %s128
      %s143 = sphi 0, %s129
      %s147 = sphi 0, %s147
      %s149 = sphi 0, %s147
      %s150 = sphi 0, %s149
      %s164 = sphi 0, %s150
      %s168 = sphi 0, %s168
      %s170 = sphi 0, %s168
      %s171 = sphi 0, %s170
      %s185 = sphi 0, %s171
      %s189 = sphi 0, %s189
      %s191 = sphi 0, %s189
      %s192 = sphi 0, %s191
      %s206 = sphi 0, %s192
      %s212 = sphi 0, %s214
      %s215 = sphi 0, %s212
      %s216 = sphi 0, %s215
      %s232 = sphi 0, %s216
    $region4: #{tpu_custom_call.1} parent=1 // loop_header_branch
      %27 = sbr.rel (%p25) target = $region8
    $region5: #{tpu_custom_call.1} parent=1 // loop_body
      %s29 = ssub.s32 %s24, 1
      %s30 = ssub.s32 %s24, 2
      %s31 = sadd.s32 %s24, 1
      %s32 = ssub.s32 %s24, %s31
      %p33 = scmp.eq.s32.totalorder %s32, 0
      %s35 = sadd.s32 %s34, 1
      %s36 = scalar_select %p33, %s34, %s35
      %p39 = pneg %p33
      %p40 = scmp.eq.s32.totalorder %s24, 1
      %p41 = por %p39, %p40
      %p42 = scmp.ne.s32.totalorder %s34, %s37
      %p43 = scmp.eq.s32.totalorder %s24, 0
      %p44 = por %p42, %p43
      %p45 = scmp.ne.s32.totalorder %s34, %s37
      %p46 = scmp.eq.s32.totalorder %s29, 1
      %p47 = por %p45, %p46
      %p48 = scmp.ne.s32.totalorder %s37, %s38
      %p49 = scmp.eq.s32.totalorder %s29, 0
      %p50 = por %p48, %p49
      %p51 = scmp.ne.s32.totalorder %s37, %s38
      %p52 = scmp.eq.s32.totalorder %s30, 1
      %p53 = por %p51, %p52
      %p55 = scmp.ne.s32.totalorder %s38, %s54
      %p56 = scmp.eq.s32.totalorder %s30, 0
      %p57 = por %p55, %p56
      %s58 = ssub.s32 %s24, %s31
      %p59 = scmp.eq.s32.totalorder %s58, 0
      %s61 = sadd.s32 %s60, 1
      %s62 = scalar_select %p59, %s60, %s61
      %p65 = pneg %p59
      %p66 = scmp.eq.s32.totalorder %s24, 1
      %p67 = por %p65, %p66
      %p68 = scmp.ne.s32.totalorder %s60, %s63
      %p69 = scmp.eq.s32.totalorder %s24, 0
      %p70 = por %p68, %p69
      %p71 = scmp.ne.s32.totalorder %s60, %s63
      %p72 = scmp.eq.s32.totalorder %s29, 1
      %p73 = por %p71, %p72
      %p74 = scmp.ne.s32.totalorder %s63, %s64
      %p75 = scmp.eq.s32.totalorder %s29, 0
      %p76 = por %p74, %p75
      %p77 = scmp.ne.s32.totalorder %s63, %s64
      %p78 = scmp.eq.s32.totalorder %s30, 1
      %p79 = por %p77, %p78
      %p81 = scmp.ne.s32.totalorder %s64, %s80
      %p82 = scmp.eq.s32.totalorder %s30, 0
      %p83 = por %p81, %p82
      %s85 = sadd.s32 %s84, 1
      %p88 = scmp.eq.s32.totalorder %s24, 1
      %p89 = scmp.ne.s32.totalorder %s84, %s86
      %p90 = scmp.eq.s32.totalorder %s24, 0
      %p91 = por %p89, %p90
      %p92 = scmp.ne.s32.totalorder %s84, %s86
      %p93 = scmp.eq.s32.totalorder %s29, 1
      %p94 = por %p92, %p93
      %p95 = scmp.ne.s32.totalorder %s86, %s87
      %p96 = scmp.eq.s32.totalorder %s29, 0
      %p97 = por %p95, %p96
      %p98 = scmp.ne.s32.totalorder %s86, %s87
      %p99 = scmp.eq.s32.totalorder %s30, 1
      %p100 = por %p98, %p99
      %p102 = scmp.ne.s32.totalorder %s87, %s101
      %p103 = scmp.eq.s32.totalorder %s30, 0
      %p104 = por %p102, %p103
      %s106 = sadd.s32 %s105, 1
      %p109 = scmp.eq.s32.totalorder %s24, 1
      %p110 = scmp.ne.s32.totalorder %s105, %s107
      %p111 = scmp.eq.s32.totalorder %s24, 0
      %p112 = por %p110, %p111
      %p113 = scmp.ne.s32.totalorder %s105, %s107
      %p114 = scmp.eq.s32.totalorder %s29, 1
      %p115 = por %p113, %p114
      %p116 = scmp.ne.s32.totalorder %s107, %s108
      %p117 = scmp.eq.s32.totalorder %s29, 0
      %p118 = por %p116, %p117
      %p119 = scmp.ne.s32.totalorder %s107, %s108
      %p120 = scmp.eq.s32.totalorder %s30, 1
      %p121 = por %p119, %p120
      %p123 = scmp.ne.s32.totalorder %s108, %s122
      %p124 = scmp.eq.s32.totalorder %s30, 0
      %p125 = por %p123, %p124
      %s127 = sadd.s32 %s126, 1
      %p130 = scmp.eq.s32.totalorder %s24, 1
      %p131 = scmp.ne.s32.totalorder %s126, %s128
      %p132 = scmp.eq.s32.totalorder %s24, 0
      %p133 = por %p131, %p132
      %p134 = scmp.ne.s32.totalorder %s126, %s128
      %p135 = scmp.eq.s32.totalorder %s29, 1
      %p136 = por %p134, %p135
      %p137 = scmp.ne.s32.totalorder %s128, %s129
      %p138 = scmp.eq.s32.totalorder %s29, 0
      %p139 = por %p137, %p138
      %p140 = scmp.ne.s32.totalorder %s128, %s129
      %p141 = scmp.eq.s32.totalorder %s30, 1
      %p142 = por %p140, %p141
      %p144 = scmp.ne.s32.totalorder %s129, %s143
      %p145 = scmp.eq.s32.totalorder %s30, 0
      %p146 = por %p144, %p145
      %s148 = sadd.s32 %s147, 1
      %p151 = scmp.eq.s32.totalorder %s24, 1
      %p152 = scmp.ne.s32.totalorder %s147, %s149
      %p153 = scmp.eq.s32.totalorder %s24, 0
      %p154 = por %p152, %p153
      %p155 = scmp.ne.s32.totalorder %s147, %s149
      %p156 = scmp.eq.s32.totalorder %s29, 1
      %p157 = por %p155, %p156
      %p158 = scmp.ne.s32.totalorder %s149, %s150
      %p159 = scmp.eq.s32.totalorder %s29, 0
      %p160 = por %p158, %p159
      %p161 = scmp.ne.s32.totalorder %s149, %s150
      %p162 = scmp.eq.s32.totalorder %s30, 1
      %p163 = por %p161, %p162
      %p165 = scmp.ne.s32.totalorder %s150, %s164
      %p166 = scmp.eq.s32.totalorder %s30, 0
      %p167 = por %p165, %p166
      %s169 = sadd.s32 %s168, 1
      %p172 = scmp.eq.s32.totalorder %s24, 1
      %p173 = scmp.ne.s32.totalorder %s168, %s170
      %p174 = scmp.eq.s32.totalorder %s24, 0
      %p175 = por %p173, %p174
      %p176 = scmp.ne.s32.totalorder %s168, %s170
      %p177 = scmp.eq.s32.totalorder %s29, 1
      %p178 = por %p176, %p177
      %p179 = scmp.ne.s32.totalorder %s170, %s171
      %p180 = scmp.eq.s32.totalorder %s29, 0
      %p181 = por %p179, %p180
      %p182 = scmp.ne.s32.totalorder %s170, %s171
      %p183 = scmp.eq.s32.totalorder %s30, 1
      %p184 = por %p182, %p183
      %p186 = scmp.ne.s32.totalorder %s171, %s185
      %p187 = scmp.eq.s32.totalorder %s30, 0
      %p188 = por %p186, %p187
      %s190 = sadd.s32 %s189, 1
      %p193 = scmp.eq.s32.totalorder %s24, 1
      %p194 = scmp.ne.s32.totalorder %s189, %s191
      %p195 = scmp.eq.s32.totalorder %s24, 0
      %p196 = por %p194, %p195
      %p197 = scmp.ne.s32.totalorder %s189, %s191
      %p198 = scmp.eq.s32.totalorder %s29, 1
      %p199 = por %p197, %p198
      %p200 = scmp.ne.s32.totalorder %s191, %s192
      %p201 = scmp.eq.s32.totalorder %s29, 0
      %p202 = por %p200, %p201
      %p203 = scmp.ne.s32.totalorder %s191, %s192
      %p204 = scmp.eq.s32.totalorder %s30, 1
      %p205 = por %p203, %p204
      %p207 = scmp.ne.s32.totalorder %s192, %s206
      %p208 = scmp.eq.s32.totalorder %s30, 0
      %p209 = por %p207, %p208
      %s210 = ssub.s32 %s24, %s31
      %p211 = scmp.eq.s32.totalorder %s210, 0
      %s213 = sadd.s32 %s212, 1
      %s214 = scalar_select %p211, %s212, %s213
      %p217 = pneg %p211
      %p218 = scmp.eq.s32.totalorder %s24, 1
      %p219 = por %p217, %p218
      %p220 = scmp.ne.s32.totalorder %s212, %s215
      %p221 = scmp.eq.s32.totalorder %s24, 0
      %p222 = por %p220, %p221
      %p223 = scmp.ne.s32.totalorder %s212, %s215
      %p224 = scmp.eq.s32.totalorder %s29, 1
      %p225 = por %p223, %p224
      %p226 = scmp.ne.s32.totalorder %s215, %s216
      %p227 = scmp.eq.s32.totalorder %s29, 0
      %p228 = por %p226, %p227
      %p229 = scmp.ne.s32.totalorder %s215, %s216
      %p230 = scmp.eq.s32.totalorder %s30, 1
      %p231 = por %p229, %p230
      %p233 = scmp.ne.s32.totalorder %s216, %s232
      %p234 = scmp.eq.s32.totalorder %s30, 0
      %p235 = por %p233, %p234
      %p236 = scmp.le.s32.totalorder 1, %s24
      %p237 = scmp.lt.s32.totalorder %s24, 3
      %p238 = pnand %p236, %p237
      %p239 = pneg %p238
      // Predicated region
      $region9: #{tpu_custom_call.1} parent=5 // pred_check
        _
      $region10: #{tpu_custom_call.1} parent=5 // pred_check_branch
        %241 = sbr.rel (%p238) target = $region12
      $region11: #{tpu_custom_call.1} parent=5 // pred_region
        %s242 = ssub.s32 %s24, 1
        // Predicated region
        $region13: #{tpu_custom_call.1} parent=11 // pred_check
          %p243 = pneg %p97
        $region14: #{tpu_custom_call.1} parent=11 // pred_check_branch
          %245 = sbr.rel (%p243) target = $region16
        $region15: #{tpu_custom_call.1} parent=11 // pred_region
          %s247 = ssub.s32 512, 512
          %248 = vsyncadd [#allocation6], %s247
          %s249 = sshll.u32 [#allocation7], 4
          %s250 = int_to_ptr.vmem [resolvable:$true] %s249
          %255 = dma.hbm_to_vmem [thread:$0]  %s2, 512, %s250, [#allocation6], 128, 128, 8
        $region16: #{tpu_custom_call.1} parent=11 // pred_fallthru
          _
        // Predicated region
        $region17: #{tpu_custom_call.1} parent=11 // pred_check
          %p256 = pneg %p118
        $region18: #{tpu_custom_call.1} parent=11 // pred_check_branch
          %258 = sbr.rel (%p256) target = $region20
        $region19: #{tpu_custom_call.1} parent=11 // pred_region
          _
        $region20: #{tpu_custom_call.1} parent=11 // pred_fallthru
          _
        // Predicated region
        $region21: #{tpu_custom_call.1} parent=11 // pred_check
          %p259 = pneg %p139
        $region22: #{tpu_custom_call.1} parent=11 // pred_check_branch
          %261 = sbr.rel (%p259) target = $region24
        $region23: #{tpu_custom_call.1} parent=11 // pred_region
          %s263 = ssub.s32 512, 512
          %264 = vsyncadd [#allocation9], %s263
          %s265 = sshll.u32 [#allocation8], 4
          %s266 = int_to_ptr.vmem [resolvable:$true] %s265
          %271 = dma.hbm_to_vmem [thread:$0]  %s4, 512, %s266, [#allocation9], 128, 128, 8
        $region24: #{tpu_custom_call.1} parent=11 // pred_fallthru
          _
        // Predicated region
        $region25: #{tpu_custom_call.1} parent=11 // pred_check
          %p272 = pneg %p160
        $region26: #{tpu_custom_call.1} parent=11 // pred_check_branch
          %274 = sbr.rel (%p272) target = $region28
        $region27: #{tpu_custom_call.1} parent=11 // pred_region
          _
        $region28: #{tpu_custom_call.1} parent=11 // pred_fallthru
          _
        // Predicated region
        $region29: #{tpu_custom_call.1} parent=11 // pred_check
          %p275 = pneg %p181
        $region30: #{tpu_custom_call.1} parent=11 // pred_check_branch
          %277 = sbr.rel (%p275) target = $region32
        $region31: #{tpu_custom_call.1} parent=11 // pred_region
          %s279 = ssub.s32 512, 512
          %280 = vsyncadd [#allocation9], %s279
          %s281 = sshll.u32 [#allocation10], 4
          %s282 = int_to_ptr.vmem [resolvable:$true] %s281
          %287 = dma.hbm_to_vmem [thread:$0]  %s6, 512, %s282, [#allocation9], 128, 128, 8
        $region32: #{tpu_custom_call.1} parent=11 // pred_fallthru
          _
        // Predicated region
        $region33: #{tpu_custom_call.1} parent=11 // pred_check
          %p288 = pneg %p202
        $region34: #{tpu_custom_call.1} parent=11 // pred_check_branch
          %290 = sbr.rel (%p288) target = $region36
        $region35: #{tpu_custom_call.1} parent=11 // pred_region
          _
        $region36: #{tpu_custom_call.1} parent=11 // pred_fallthru
          _
      $region12: #{tpu_custom_call.1} parent=5 // pred_fallthru
        _
      %p291 = scmp.lt.s32.totalorder %s24, 2
      // Predicated region
      $region37: #{tpu_custom_call.1} parent=5 // pred_check
        %p292 = pneg %p291
      $region38: #{tpu_custom_call.1} parent=5 // pred_check_branch
        %294 = sbr.rel (%p292) target = $region40
      $region39: #{tpu_custom_call.1} parent=5 // pred_region
        // Predicated region
        $region41: #{tpu_custom_call.1} parent=39 // pred_check
          %p295 = pneg %p44
        $region42: #{tpu_custom_call.1} parent=39 // pred_check_branch
          %297 = sbr.rel (%p295) target = $region44
        $region43: #{tpu_custom_call.1} parent=39 // pred_region
          %s298 = sand.u32 %s34, 1
          %s299 = scalar_lea.sflag [#allocation3], %s298
          %s300 = sand.u32 %s34, 1
          %s301 = smul.addr %s300, 8
          %s302 = scalar_lea.vmem [#allocation2], %s301
          %s304 = ssub.s32 128, 128
          %305 = vsyncadd %s299, %s304
          %s306 = smul.addr %s24, 128
          %s307 = scalar_lea.hbm %s0, %s306
          %s309 = sshll.u32 %s302, 4
          %s310 = int_to_ptr.vmem [resolvable:$true] %s309
          %312 = dma.hbm_to_vmem [thread:$0]  %s307, 128, %s310, %s299
        $region44: #{tpu_custom_call.1} parent=39 // pred_fallthru
          _
        // Predicated region
        $region45: #{tpu_custom_call.1} parent=39 // pred_check
          %p313 = pneg %p70
        $region46: #{tpu_custom_call.1} parent=39 // pred_check_branch
          %315 = sbr.rel (%p313) target = $region48
        $region47: #{tpu_custom_call.1} parent=39 // pred_region
          %s316 = sand.u32 %s24, 1
          %s317 = scalar_lea.sflag [#allocation6], %s316
          %s318 = sand.u32 %s60, 1
          %s319 = smul.addr %s318, 8
          %s320 = scalar_lea.vmem [#allocation5], %s319
          %s322 = ssub.s32 128, 128
          %323 = vsyncadd %s317, %s322
          %s324 = smul.addr %s24, 128
          %s325 = scalar_lea.hbm %s1, %s324
          %s327 = sshll.u32 %s320, 4
          %s328 = int_to_ptr.vmem [resolvable:$true] %s327
          %330 = dma.hbm_to_vmem [thread:$0]  %s325, 128, %s328, %s317
        $region48: #{tpu_custom_call.1} parent=39 // pred_fallthru
          _
      $region40: #{tpu_custom_call.1} parent=5 // pred_fallthru
        _
      %p331 = scmp.le.s32.totalorder 1, %s24
      %p332 = scmp.lt.s32.totalorder %s24, 3
      %p333 = pnand %p331, %p332
      %p334 = pneg %p333
      // Predicated region
      $region49: #{tpu_custom_call.1} parent=5 // pred_check
        _
      $region50: #{tpu_custom_call.1} parent=5 // pred_check_branch
        %336 = sbr.rel (%p333) target = $region52
      $region51: #{tpu_custom_call.1} parent=5 // pred_region
        %s337 = ssub.s32 %s24, 1
        %s338 = sand.u32 %s37, 1
        %s339 = scalar_lea.sflag [#allocation3], %s338
        %s340 = sand.u32 %s37, 1
        %s341 = smul.addr %s340, 8
        %s342 = scalar_lea.vmem [#allocation2], %s341
        // Predicated region
        $region53: #{tpu_custom_call.1} parent=51 // pred_check
          %p343 = pneg %p50
        $region54: #{tpu_custom_call.1} parent=51 // pred_check_branch
          %345 = sbr.rel (%p343) target = $region56
        $region55: #{tpu_custom_call.1} parent=51 // pred_region
          %346 = dma.done %s339, 128
        $region56: #{tpu_custom_call.1} parent=51 // pred_fallthru
          _
        %s347 = sand.u32 %s29, 1
        %s348 = scalar_lea.sflag [#allocation6], %s347
        %s349 = sand.u32 %s63, 1
        %s350 = smul.addr %s349, 8
        %s351 = scalar_lea.vmem [#allocation5], %s350
        // Predicated region
        $region57: #{tpu_custom_call.1} parent=51 // pred_check
          %p352 = pneg %p76
        $region58: #{tpu_custom_call.1} parent=51 // pred_check_branch
          %354 = sbr.rel (%p352) target = $region60
        $region59: #{tpu_custom_call.1} parent=51 // pred_region
          %355 = dma.done %s348, 128
        $region60: #{tpu_custom_call.1} parent=51 // pred_fallthru
          _
        // Predicated region
        $region61: #{tpu_custom_call.1} parent=51 // pred_check
          %p356 = pneg %p97
        $region62: #{tpu_custom_call.1} parent=51 // pred_check_branch
          %358 = sbr.rel (%p356) target = $region64
        $region63: #{tpu_custom_call.1} parent=51 // pred_region
          %359 = dma.done [#allocation6], 512
        $region64: #{tpu_custom_call.1} parent=51 // pred_fallthru
          _
        // Predicated region
        $region65: #{tpu_custom_call.1} parent=51 // pred_check
          %p360 = pneg %p139
        $region66: #{tpu_custom_call.1} parent=51 // pred_check_branch
          %362 = sbr.rel (%p360) target = $region68
        $region67: #{tpu_custom_call.1} parent=51 // pred_region
          %363 = dma.done [#allocation9], 512
        $region68: #{tpu_custom_call.1} parent=51 // pred_fallthru
          _
        // Predicated region
        $region69: #{tpu_custom_call.1} parent=51 // pred_check
          %p364 = pneg %p181
        $region70: #{tpu_custom_call.1} parent=51 // pred_check_branch
          %366 = sbr.rel (%p364) target = $region72
        $region71: #{tpu_custom_call.1} parent=51 // pred_region
          %367 = dma.done [#allocation9], 512
        $region72: #{tpu_custom_call.1} parent=51 // pred_fallthru
          _
        %s368 = sand.u32 %s37, 1
        %s369 = scalar_lea.sflag [#allocation3], %s368
        %s370 = sand.u32 %s37, 1
        %s371 = smul.addr %s370, 8
        %s372 = scalar_lea.vmem [#allocation2], %s371
        %p373 = pneg %p50
        %p374 = pneg %p47
        %s375 = sand.u32 %s29, 1
        %s376 = scalar_lea.sflag [#allocation6], %s375
        %s377 = sand.u32 %s63, 1
        %s378 = smul.addr %s377, 8
        %s379 = scalar_lea.vmem [#allocation5], %s378
        %p380 = pneg %p76
        %p381 = pneg %p73
        %p382 = pneg %p97
        %p383 = pneg %p94
        %p384 = pneg %p118
        %p385 = pneg %p115
        %p386 = pneg %p139
        %p387 = pneg %p136
        %p388 = pneg %p160
        %p389 = pneg %p157
        %p390 = pneg %p181
        %p391 = pneg %p178
        %p392 = pneg %p202
        %p393 = pneg %p199
        %p394 = pneg %p228
        %p395 = pneg %p225
        %s396 = sand.u32 %s215, 1
        %s397 = scalar_lea.sflag [#allocation4], %s396
        %s398 = sand.u32 %s215, 1
        %s399 = smul.addr %s398, 8
        %s400 = scalar_lea.vmem [#allocation11], %s399
        %v401 = vld [vmem:[%s342] sm:$0xff]
        %v402 = vld [vmem:[%s351] sm:$0xff]
        %v403 = vld [vmem:[#allocation7] sm:$0xff]
        %v404 = vld [vmem:[#allocation7 + $0x8] sm:$0xff]
        %v405 = vld [vmem:[#allocation7 + $0x10] sm:$0xff]
        %v406 = vld [vmem:[#allocation7 + $0x18] sm:$0xff]
        %v407 = vld [vmem:[%s3] sm:$0x1]
        %v409 = vlaneseq
        %v410 = vshrl.u32 %v409, 7
        %v411 = vsub.s32 0, %v410
        %v412 = vrot.slane %v407, %v411
        %vm414 = vcmask 261120
        %v416 = vsel %vm414, %v401, 0
        %418 = vmatprep.subr.mxu0 0.0
        %419 = vmatpush1.msra.mxu0 0.0
        %420 = vmatprep.subr.mxu0 0.0
        %421 = vmatpush1.msra.mxu0 0.0
        %422 = vmatprep.subr.mxu0 0.0
        %423 = vmatpush1.msra.mxu0 0.0
        %424 = vmatprep.subr.mxu0 0.0
        %425 = vmatpush1.msra.mxu0 0.0
        %426 = vmatprep.subr.mxu0 0.0
        %427 = vmatpush1.msra.mxu0 0.0
        %428 = vmatprep.subr.mxu0 0.0
        %429 = vmatpush1.msra.mxu0 0.0
        %430 = vmatprep.subr.mxu0 0.0
        %431 = vmatpush1.msra.mxu0 0.0
        %432 = vmatprep.subr.mxu0 0.0
        %433 = vmatpush1.msra.mxu0 0.0
        %434 = vmatprep.subr.mxu0 0.0
        %435 = vmatpush1.msra.mxu0 0.0
        %436 = vmatprep.subr.mxu0 0.0
        %437 = vmatpush1.msra.mxu0 0.0
        %438 = vmatprep.subr.mxu0 0.0
        %439 = vmatpush1.msra.mxu0 0.0
        %440 = vmatprep.subr.mxu0 0.0
        %441 = vmatpush1.msra.mxu0 0.0
        %442 = vmatprep.subr.mxu0 0.0
        %443 = vmatpush1.msra.mxu0 %v406
        %444 = vmatprep.subr.mxu0 0.0
        %445 = vmatpush1.msra.mxu0 %v405
        %446 = vmatprep.subr.mxu0 0.0
        %447 = vmatpush1.msra.mxu0 %v404
        %448 = vmatprep.subr.mxu0 0.0
        %449 = vmatpush1.msra.mxu0 %v403
        %450 = vmatprep.subr.mxu0 0.0
        %451 = vmatpush2.msra.mxu0 0.0
        %452 = vmatprep.subr.mxu0 0.0
        %453 = vmatpush2.msra.mxu0 0.0
        %454 = vmatprep.subr.mxu0 0.0
        %455 = vmatpush2.msra.mxu0 0.0
        %456 = vmatprep.subr.mxu0 0.0
        %457 = vmatpush2.msra.mxu0 0.0
        %458 = vmatprep.subr.mxu0 0.0
        %459 = vmatpush2.msra.mxu0 0.0
        %460 = vmatprep.subr.mxu0 0.0
        %461 = vmatpush2.msra.mxu0 0.0
        %462 = vmatprep.subr.mxu0 0.0
        %463 = vmatpush2.msra.mxu0 0.0
        %464 = vmatprep.subr.mxu0 0.0
        %465 = vmatpush2.msra.mxu0 0.0
        %466 = vmatprep.subr.mxu0 0.0
        %467 = vmatpush2.msra.mxu0 0.0
        %468 = vmatprep.subr.mxu0 0.0
        %469 = vmatpush2.msra.mxu0 0.0
        %470 = vmatprep.subr.mxu0 0.0
        %471 = vmatpush2.msra.mxu0 0.0
        %472 = vmatprep.subr.mxu0 0.0
        %473 = vmatpush2.msra.mxu0 0.0
        %474 = vmatprep.subr.mxu0 0.0
        %475 = vmatpush2.msra.mxu0 0.0
        %476 = vmatprep.subr.mxu0 0.0
        %477 = vmatpush2.msra.mxu0 0.0
        %478 = vmatprep.subr.mxu0 0.0
        %479 = vmatpush2.msra.mxu0 0.0
        %480 = vmatprep.subr.mxu0 0.0
        %481 = vmatpush2.msra.mxu0 0.0
        %482 = vmatprep.mubr.f32.mxu0 0.0
        %483 = vmatmul.mubr.f32.gmra.mxu0 %v416
        %v484 = vpop.f32.mrf.mxu0
        %v485 = vadd.f32 %v412, %v484
        %v486 = vpop.f32.mrf.mxu0
        %487 = vdwg.mxu0
        %v488 = vld [vmem:[#allocation10] sm:$0xff]
        %v489 = vld [vmem:[#allocation10 + $0x8] sm:$0xff]
        %v490 = vld [vmem:[#allocation10 + $0x10] sm:$0xff]
        %v491 = vld [vmem:[#allocation10 + $0x18] sm:$0xff]
        %v492 = vmul.f32 %v485, %v485
        %v494 = vsel %vm414, %v492, 0
        %496 = vmatprep.subr.mxu0 0.0
        %497 = vmatpush1.msra.mxu0 0.0
        %498 = vmatprep.subr.mxu0 0.0
        %499 = vmatpush1.msra.mxu0 0.0
        %500 = vmatprep.subr.mxu0 0.0
        %501 = vmatpush1.msra.mxu0 0.0
        %502 = vmatprep.subr.mxu0 0.0
        %503 = vmatpush1.msra.mxu0 0.0
        %504 = vmatprep.subr.mxu0 0.0
        %505 = vmatpush1.msra.mxu0 0.0
        %506 = vmatprep.subr.mxu0 0.0
        %507 = vmatpush1.msra.mxu0 0.0
        %508 = vmatprep.subr.mxu0 0.0
        %509 = vmatpush1.msra.mxu0 0.0
        %510 = vmatprep.subr.mxu0 0.0
        %511 = vmatpush1.msra.mxu0 0.0
        %512 = vmatprep.subr.mxu0 0.0
        %513 = vmatpush1.msra.mxu0 0.0
        %514 = vmatprep.subr.mxu0 0.0
        %515 = vmatpush1.msra.mxu0 0.0
        %516 = vmatprep.subr.mxu0 0.0
        %517 = vmatpush1.msra.mxu0 0.0
        %518 = vmatprep.subr.mxu0 0.0
        %519 = vmatpush1.msra.mxu0 0.0
        %520 = vmatprep.subr.mxu0 0.0
        %v521 = vand.u32 %v491, 4294901760
        %522 = vmatpush1.msra.mxu0 %v521
        %523 = vmatprep.subr.mxu0 0.0
        %v524 = vand.u32 %v490, 4294901760
        %525 = vmatpush1.msra.mxu0 %v524
        %526 = vmatprep.subr.mxu0 0.0
        %v527 = vand.u32 %v489, 4294901760
        %528 = vmatpush1.msra.mxu0 %v527
        %529 = vmatprep.subr.mxu0 0.0
        %v530 = vand.u32 %v488, 4294901760
        %531 = vmatpush1.msra.mxu0 %v530
        %532 = vmatprep.subr.mxu0 0.0
        %533 = vmatpush2.msra.mxu0 0.0
        %534 = vmatprep.subr.mxu0 0.0
        %535 = vmatpush2.msra.mxu0 0.0
        %536 = vmatprep.subr.mxu0 0.0
        %537 = vmatpush2.msra.mxu0 0.0
        %538 = vmatprep.subr.mxu0 0.0
        %539 = vmatpush2.msra.mxu0 0.0
        %540 = vmatprep.subr.mxu0 0.0
        %541 = vmatpush2.msra.mxu0 0.0
        %542 = vmatprep.subr.mxu0 0.0
        %543 = vmatpush2.msra.mxu0 0.0
        %544 = vmatprep.subr.mxu0 0.0
        %545 = vmatpush2.msra.mxu0 0.0
        %546 = vmatprep.subr.mxu0 0.0
        %547 = vmatpush2.msra.mxu0 0.0
        %548 = vmatprep.subr.mxu0 0.0
        %549 = vmatpush2.msra.mxu0 0.0
        %550 = vmatprep.subr.mxu0 0.0
        %551 = vmatpush2.msra.mxu0 0.0
        %552 = vmatprep.subr.mxu0 0.0
        %553 = vmatpush2.msra.mxu0 0.0
        %554 = vmatprep.subr.mxu0 0.0
        %555 = vmatpush2.msra.mxu0 0.0
        %556 = vmatprep.subr.mxu0 0.0
        %557 = vmatpush2.msra.mxu0 0.0
        %558 = vmatprep.subr.mxu0 0.0
        %559 = vmatpush2.msra.mxu0 0.0
        %560 = vmatprep.subr.mxu0 0.0
        %561 = vmatpush2.msra.mxu0 0.0
        %562 = vmatprep.subr.mxu0 0.0
        %563 = vmatpush2.msra.mxu0 0.0
        %564 = vmatprep.mubr.f32.mxu0 0.0
        %v565 = vand.u32 %v494, 4294901760
        %v566 = vsub.f32 %v494, %v565
        %v567 = vand.u32 %v566, 4294901760
        %v568 = vsub.f32 %v566, %v567
        %v569 = vand.u32 %v568, 4294901760
        %570 = vmatmul.mubr.f32.gmra.mxu0 %v569
        %v571 = vpop.f32.mrf.mxu0
        %v572 = vadd.f32 0.0, %v571
        %v573 = vpop.f32.mrf.mxu0
        %574 = vdwg.mxu0
        %575 = vmatprep.subr.mxu0 0.0
        %576 = vmatpush1.msra.mxu0 0.0
        %577 = vmatprep.subr.mxu0 0.0
        %578 = vmatpush1.msra.mxu0 0.0
        %579 = vmatprep.subr.mxu0 0.0
        %580 = vmatpush1.msra.mxu0 0.0
        %581 = vmatprep.subr.mxu0 0.0
        %582 = vmatpush1.msra.mxu0 0.0
        %583 = vmatprep.subr.mxu0 0.0
        %584 = vmatpush1.msra.mxu0 0.0
        %585 = vmatprep.subr.mxu0 0.0
        %586 = vmatpush1.msra.mxu0 0.0
        %587 = vmatprep.subr.mxu0 0.0
        %588 = vmatpush1.msra.mxu0 0.0
        %589 = vmatprep.subr.mxu0 0.0
        %590 = vmatpush1.msra.mxu0 0.0
        %591 = vmatprep.subr.mxu0 0.0
        %592 = vmatpush1.msra.mxu0 0.0
        %593 = vmatprep.subr.mxu0 0.0
        %594 = vmatpush1.msra.mxu0 0.0
        %595 = vmatprep.subr.mxu0 0.0
        %596 = vmatpush1.msra.mxu0 0.0
        %597 = vmatprep.subr.mxu0 0.0
        %598 = vmatpush1.msra.mxu0 0.0
        %599 = vmatprep.subr.mxu0 0.0
        %v600 = vand.u32 %v491, 4294901760
        %v601 = vsub.f32 %v491, %v600
        %v602 = vand.u32 %v601, 4294901760
        %v603 = vsub.f32 %v601, %v602
        %v604 = vand.u32 %v603, 4294901760
        %605 = vmatpush1.msra.mxu0 %v604
        %606 = vmatprep.subr.mxu0 0.0
        %v607 = vand.u32 %v490, 4294901760
        %v608 = vsub.f32 %v490, %v607
        %v609 = vand.u32 %v608, 4294901760
        %v610 = vsub.f32 %v608, %v609
        %v611 = vand.u32 %v610, 4294901760
        %612 = vmatpush1.msra.mxu0 %v611
        %613 = vmatprep.subr.mxu0 0.0
        %v614 = vand.u32 %v489, 4294901760
        %v615 = vsub.f32 %v489, %v614
        %v616 = vand.u32 %v615, 4294901760
        %v617 = vsub.f32 %v615, %v616
        %v618 = vand.u32 %v617, 4294901760
        %619 = vmatpush1.msra.mxu0 %v618
        %620 = vmatprep.subr.mxu0 0.0
        %v621 = vand.u32 %v488, 4294901760
        %v622 = vsub.f32 %v488, %v621
        %v623 = vand.u32 %v622, 4294901760
        %v624 = vsub.f32 %v622, %v623
        %v625 = vand.u32 %v624, 4294901760
        %626 = vmatpush1.msra.mxu0 %v625
        %627 = vmatprep.subr.mxu0 0.0
        %628 = vmatpush2.msra.mxu0 0.0
        %629 = vmatprep.subr.mxu0 0.0
        %630 = vmatpush2.msra.mxu0 0.0
        %631 = vmatprep.subr.mxu0 0.0
        %632 = vmatpush2.msra.mxu0 0.0
        %633 = vmatprep.subr.mxu0 0.0
        %634 = vmatpush2.msra.mxu0 0.0
        %635 = vmatprep.subr.mxu0 0.0
        %636 = vmatpush2.msra.mxu0 0.0
        %637 = vmatprep.subr.mxu0 0.0
        %638 = vmatpush2.msra.mxu0 0.0
        %639 = vmatprep.subr.mxu0 0.0
        %640 = vmatpush2.msra.mxu0 0.0
        %641 = vmatprep.subr.mxu0 0.0
        %642 = vmatpush2.msra.mxu0 0.0
        %643 = vmatprep.subr.mxu0 0.0
        %644 = vmatpush2.msra.mxu0 0.0
        %645 = vmatprep.subr.mxu0 0.0
        %646 = vmatpush2.msra.mxu0 0.0
        %647 = vmatprep.subr.mxu0 0.0
        %648 = vmatpush2.msra.mxu0 0.0
        %649 = vmatprep.subr.mxu0 0.0
        %650 = vmatpush2.msra.mxu0 0.0
        %651 = vmatprep.subr.mxu0 0.0
        %652 = vmatpush2.msra.mxu0 0.0
        %653 = vmatprep.subr.mxu0 0.0
        %654 = vmatpush2.msra.mxu0 0.0
        %655 = vmatprep.subr.mxu0 0.0
        %656 = vmatpush2.msra.mxu0 0.0
        %657 = vmatprep.subr.mxu0 0.0
        %658 = vmatpush2.msra.mxu0 0.0
        %659 = vmatprep.mubr.f32.mxu0 0.0
        %v660 = vand.u32 %v494, 4294901760
        %661 = vmatmul.mubr.f32.gmra.mxu0 %v660
        %v662 = vpop.f32.mrf.mxu0
        %v663 = vadd.f32 %v572, %v662
        %v664 = vpop.f32.mrf.mxu0
        %665 = vdwg.mxu0
        %666 = vmatprep.subr.mxu0 0.0
        %667 = vmatpush1.msra.mxu0 0.0
        %668 = vmatprep.subr.mxu0 0.0
        %669 = vmatpush1.msra.mxu0 0.0
        %670 = vmatprep.subr.mxu0 0.0
        %671 = vmatpush1.msra.mxu0 0.0
        %672 = vmatprep.subr.mxu0 0.0
        %673 = vmatpush1.msra.mxu0 0.0
        %674 = vmatprep.subr.mxu0 0.0
        %675 = vmatpush1.msra.mxu0 0.0
        %676 = vmatprep.subr.mxu0 0.0
        %677 = vmatpush1.msra.mxu0 0.0
        %678 = vmatprep.subr.mxu0 0.0
        %679 = vmatpush1.msra.mxu0 0.0
        %680 = vmatprep.subr.mxu0 0.0
        %681 = vmatpush1.msra.mxu0 0.0
        %682 = vmatprep.subr.mxu0 0.0
        %683 = vmatpush1.msra.mxu0 0.0
        %684 = vmatprep.subr.mxu0 0.0
        %685 = vmatpush1.msra.mxu0 0.0
        %686 = vmatprep.subr.mxu0 0.0
        %687 = vmatpush1.msra.mxu0 0.0
        %688 = vmatprep.subr.mxu0 0.0
        %689 = vmatpush1.msra.mxu0 0.0
        %690 = vmatprep.subr.mxu0 0.0
        %v691 = vand.u32 %v491, 4294901760
        %v692 = vsub.f32 %v491, %v691
        %693 = vmatpush1.msra.mxu0 %v692
        %694 = vmatprep.subr.mxu0 0.0
        %v695 = vand.u32 %v490, 4294901760
        %v696 = vsub.f32 %v490, %v695
        %697 = vmatpush1.msra.mxu0 %v696
        %698 = vmatprep.subr.mxu0 0.0
        %v699 = vand.u32 %v489, 4294901760
        %v700 = vsub.f32 %v489, %v699
        %701 = vmatpush1.msra.mxu0 %v700
        %702 = vmatprep.subr.mxu0 0.0
        %v703 = vand.u32 %v488, 4294901760
        %v704 = vsub.f32 %v488, %v703
        %705 = vmatpush1.msra.mxu0 %v704
        %706 = vmatprep.subr.mxu0 0.0
        %707 = vmatpush2.msra.mxu0 0.0
        %708 = vmatprep.subr.mxu0 0.0
        %709 = vmatpush2.msra.mxu0 0.0
        %710 = vmatprep.subr.mxu0 0.0
        %711 = vmatpush2.msra.mxu0 0.0
        %712 = vmatprep.subr.mxu0 0.0
        %713 = vmatpush2.msra.mxu0 0.0
        %714 = vmatprep.subr.mxu0 0.0
        %715 = vmatpush2.msra.mxu0 0.0
        %716 = vmatprep.subr.mxu0 0.0
        %717 = vmatpush2.msra.mxu0 0.0
        %718 = vmatprep.subr.mxu0 0.0
        %719 = vmatpush2.msra.mxu0 0.0
        %720 = vmatprep.subr.mxu0 0.0
        %721 = vmatpush2.msra.mxu0 0.0
        %722 = vmatprep.subr.mxu0 0.0
        %723 = vmatpush2.msra.mxu0 0.0
        %724 = vmatprep.subr.mxu0 0.0
        %725 = vmatpush2.msra.mxu0 0.0
        %726 = vmatprep.subr.mxu0 0.0
        %727 = vmatpush2.msra.mxu0 0.0
        %728 = vmatprep.subr.mxu0 0.0
        %729 = vmatpush2.msra.mxu0 0.0
        %730 = vmatprep.subr.mxu0 0.0
        %731 = vmatpush2.msra.mxu0 0.0
        %732 = vmatprep.subr.mxu0 0.0
        %733 = vmatpush2.msra.mxu0 0.0
        %734 = vmatprep.subr.mxu0 0.0
        %735 = vmatpush2.msra.mxu0 0.0
        %736 = vmatprep.subr.mxu0 0.0
        %737 = vmatpush2.msra.mxu0 0.0
        %738 = vmatprep.mubr.f32.mxu0 0.0
        %v739 = vand.u32 %v494, 4294901760
        %v740 = vsub.f32 %v494, %v739
        %741 = vmatmul.mubr.f32.gmra.mxu0 %v740
        %v742 = vpop.f32.mrf.mxu0
        %v743 = vadd.f32 %v663, %v742
        %v744 = vpop.f32.mrf.mxu0
        %745 = vdwg.mxu0
        %746 = vmatprep.subr.mxu0 0.0
        %747 = vmatpush1.msra.mxu0 0.0
        %748 = vmatprep.subr.mxu0 0.0
        %749 = vmatpush1.msra.mxu0 0.0
        %750 = vmatprep.subr.mxu0 0.0
        %751 = vmatpush1.msra.mxu0 0.0
        %752 = vmatprep.subr.mxu0 0.0
        %753 = vmatpush1.msra.mxu0 0.0
        %754 = vmatprep.subr.mxu0 0.0
        %755 = vmatpush1.msra.mxu0 0.0
        %756 = vmatprep.subr.mxu0 0.0
        %757 = vmatpush1.msra.mxu0 0.0
        %758 = vmatprep.subr.mxu0 0.0
        %759 = vmatpush1.msra.mxu0 0.0
        %760 = vmatprep.subr.mxu0 0.0
        %761 = vmatpush1.msra.mxu0 0.0
        %762 = vmatprep.subr.mxu0 0.0
        %763 = vmatpush1.msra.mxu0 0.0
        %764 = vmatprep.subr.mxu0 0.0
        %765 = vmatpush1.msra.mxu0 0.0
        %766 = vmatprep.subr.mxu0 0.0
        %767 = vmatpush1.msra.mxu0 0.0
        %768 = vmatprep.subr.mxu0 0.0
        %769 = vmatpush1.msra.mxu0 0.0
        %770 = vmatprep.subr.mxu0 0.0
        %v771 = vand.u32 %v491, 4294901760
        %772 = vmatpush1.msra.mxu0 %v771
        %773 = vmatprep.subr.mxu0 0.0
        %v774 = vand.u32 %v490, 4294901760
        %775 = vmatpush1.msra.mxu0 %v774
        %776 = vmatprep.subr.mxu0 0.0
        %v777 = vand.u32 %v489, 4294901760
        %778 = vmatpush1.msra.mxu0 %v777
        %779 = vmatprep.subr.mxu0 0.0
        %v780 = vand.u32 %v488, 4294901760
        %781 = vmatpush1.msra.mxu0 %v780
        %782 = vmatprep.subr.mxu0 0.0
        %783 = vmatpush2.msra.mxu0 0.0
        %784 = vmatprep.subr.mxu0 0.0
        %785 = vmatpush2.msra.mxu0 0.0
        %786 = vmatprep.subr.mxu0 0.0
        %787 = vmatpush2.msra.mxu0 0.0
        %788 = vmatprep.subr.mxu0 0.0
        %789 = vmatpush2.msra.mxu0 0.0
        %790 = vmatprep.subr.mxu0 0.0
        %791 = vmatpush2.msra.mxu0 0.0
        %792 = vmatprep.subr.mxu0 0.0
        %793 = vmatpush2.msra.mxu0 0.0
        %794 = vmatprep.subr.mxu0 0.0
        %795 = vmatpush2.msra.mxu0 0.0
        %796 = vmatprep.subr.mxu0 0.0
        %797 = vmatpush2.msra.mxu0 0.0
        %798 = vmatprep.subr.mxu0 0.0
        %799 = vmatpush2.msra.mxu0 0.0
        %800 = vmatprep.subr.mxu0 0.0
        %801 = vmatpush2.msra.mxu0 0.0
        %802 = vmatprep.subr.mxu0 0.0
        %803 = vmatpush2.msra.mxu0 0.0
        %804 = vmatprep.subr.mxu0 0.0
        %805 = vmatpush2.msra.mxu0 0.0
        %806 = vmatprep.subr.mxu0 0.0
        %807 = vmatpush2.msra.mxu0 0.0
        %808 = vmatprep.subr.mxu0 0.0
        %809 = vmatpush2.msra.mxu0 0.0
        %810 = vmatprep.subr.mxu0 0.0
        %811 = vmatpush2.msra.mxu0 0.0
        %812 = vmatprep.subr.mxu0 0.0
        %813 = vmatpush2.msra.mxu0 0.0
        %814 = vmatprep.mubr.f32.mxu0 0.0
        %v815 = vand.u32 %v494, 4294901760
        %v816 = vsub.f32 %v494, %v815
        %v817 = vand.u32 %v816, 4294901760
        %818 = vmatmul.mubr.f32.gmra.mxu0 %v817
        %v819 = vpop.f32.mrf.mxu0
        %v820 = vadd.f32 %v743, %v819
        %v821 = vpop.f32.mrf.mxu0
        %822 = vdwg.mxu0
        %823 = vmatprep.subr.mxu0 0.0
        %824 = vmatpush1.msra.mxu0 0.0
        %825 = vmatprep.subr.mxu0 0.0
        %826 = vmatpush1.msra.mxu0 0.0
        %827 = vmatprep.subr.mxu0 0.0
        %828 = vmatpush1.msra.mxu0 0.0
        %829 = vmatprep.subr.mxu0 0.0
        %830 = vmatpush1.msra.mxu0 0.0
        %831 = vmatprep.subr.mxu0 0.0
        %832 = vmatpush1.msra.mxu0 0.0
        %833 = vmatprep.subr.mxu0 0.0
        %834 = vmatpush1.msra.mxu0 0.0
        %835 = vmatprep.subr.mxu0 0.0
        %836 = vmatpush1.msra.mxu0 0.0
        %837 = vmatprep.subr.mxu0 0.0
        %838 = vmatpush1.msra.mxu0 0.0
        %839 = vmatprep.subr.mxu0 0.0
        %840 = vmatpush1.msra.mxu0 0.0
        %841 = vmatprep.subr.mxu0 0.0
        %842 = vmatpush1.msra.mxu0 0.0
        %843 = vmatprep.subr.mxu0 0.0
        %844 = vmatpush1.msra.mxu0 0.0
        %845 = vmatprep.subr.mxu0 0.0
        %846 = vmatpush1.msra.mxu0 0.0
        %847 = vmatprep.subr.mxu0 0.0
        %v848 = vand.u32 %v491, 4294901760
        %v849 = vsub.f32 %v491, %v848
        %v850 = vand.u32 %v849, 4294901760
        %851 = vmatpush1.msra.mxu0 %v850
        %852 = vmatprep.subr.mxu0 0.0
        %v853 = vand.u32 %v490, 4294901760
        %v854 = vsub.f32 %v490, %v853
        %v855 = vand.u32 %v854, 4294901760
        %856 = vmatpush1.msra.mxu0 %v855
        %857 = vmatprep.subr.mxu0 0.0
        %v858 = vand.u32 %v489, 4294901760
        %v859 = vsub.f32 %v489, %v858
        %v860 = vand.u32 %v859, 4294901760
        %861 = vmatpush1.msra.mxu0 %v860
        %862 = vmatprep.subr.mxu0 0.0
        %v863 = vand.u32 %v488, 4294901760
        %v864 = vsub.f32 %v488, %v863
        %v865 = vand.u32 %v864, 4294901760
        %866 = vmatpush1.msra.mxu0 %v865
        %867 = vmatprep.subr.mxu0 0.0
        %868 = vmatpush2.msra.mxu0 0.0
        %869 = vmatprep.subr.mxu0 0.0
        %870 = vmatpush2.msra.mxu0 0.0
        %871 = vmatprep.subr.mxu0 0.0
        %872 = vmatpush2.msra.mxu0 0.0
        %873 = vmatprep.subr.mxu0 0.0
        %874 = vmatpush2.msra.mxu0 0.0
        %875 = vmatprep.subr.mxu0 0.0
        %876 = vmatpush2.msra.mxu0 0.0
        %877 = vmatprep.subr.mxu0 0.0
        %878 = vmatpush2.msra.mxu0 0.0
        %879 = vmatprep.subr.mxu0 0.0
        %880 = vmatpush2.msra.mxu0 0.0
        %881 = vmatprep.subr.mxu0 0.0
        %882 = vmatpush2.msra.mxu0 0.0
        %883 = vmatprep.subr.mxu0 0.0
        %884 = vmatpush2.msra.mxu0 0.0
        %885 = vmatprep.subr.mxu0 0.0
        %886 = vmatpush2.msra.mxu0 0.0
        %887 = vmatprep.subr.mxu0 0.0
        %888 = vmatpush2.msra.mxu0 0.0
        %889 = vmatprep.subr.mxu0 0.0
        %890 = vmatpush2.msra.mxu0 0.0
        %891 = vmatprep.subr.mxu0 0.0
        %892 = vmatpush2.msra.mxu0 0.0
        %893 = vmatprep.subr.mxu0 0.0
        %894 = vmatpush2.msra.mxu0 0.0
        %895 = vmatprep.subr.mxu0 0.0
        %896 = vmatpush2.msra.mxu0 0.0
        %897 = vmatprep.subr.mxu0 0.0
        %898 = vmatpush2.msra.mxu0 0.0
        %899 = vmatprep.mubr.f32.mxu0 0.0
        %v900 = vand.u32 %v494, 4294901760
        %901 = vmatmul.mubr.f32.gmra.mxu0 %v900
        %v902 = vpop.f32.mrf.mxu0
        %v903 = vadd.f32 %v820, %v902
        %v904 = vpop.f32.mrf.mxu0
        %905 = vdwg.mxu0
        %906 = vmatprep.subr.mxu0 0.0
        %907 = vmatpush1.msra.mxu0 0.0
        %908 = vmatprep.subr.mxu0 0.0
        %909 = vmatpush1.msra.mxu0 0.0
        %910 = vmatprep.subr.mxu0 0.0
        %911 = vmatpush1.msra.mxu0 0.0
        %912 = vmatprep.subr.mxu0 0.0
        %913 = vmatpush1.msra.mxu0 0.0
        %914 = vmatprep.subr.mxu0 0.0
        %915 = vmatpush1.msra.mxu0 0.0
        %916 = vmatprep.subr.mxu0 0.0
        %917 = vmatpush1.msra.mxu0 0.0
        %918 = vmatprep.subr.mxu0 0.0
        %919 = vmatpush1.msra.mxu0 0.0
        %920 = vmatprep.subr.mxu0 0.0
        %921 = vmatpush1.msra.mxu0 0.0
        %922 = vmatprep.subr.mxu0 0.0
        %923 = vmatpush1.msra.mxu0 0.0
        %924 = vmatprep.subr.mxu0 0.0
        %925 = vmatpush1.msra.mxu0 0.0
        %926 = vmatprep.subr.mxu0 0.0
        %927 = vmatpush1.msra.mxu0 0.0
        %928 = vmatprep.subr.mxu0 0.0
        %929 = vmatpush1.msra.mxu0 0.0
        %930 = vmatprep.subr.mxu0 0.0
        %v931 = vand.u32 %v491, 4294901760
        %932 = vmatpush1.msra.mxu0 %v931
        %933 = vmatprep.subr.mxu0 0.0
        %v934 = vand.u32 %v490, 4294901760
        %935 = vmatpush1.msra.mxu0 %v934
        %936 = vmatprep.subr.mxu0 0.0
        %v937 = vand.u32 %v489, 4294901760
        %938 = vmatpush1.msra.mxu0 %v937
        %939 = vmatprep.subr.mxu0 0.0
        %v940 = vand.u32 %v488, 4294901760
        %941 = vmatpush1.msra.mxu0 %v940
        %942 = vmatprep.subr.mxu0 0.0
        %943 = vmatpush2.msra.mxu0 0.0
        %944 = vmatprep.subr.mxu0 0.0
        %945 = vmatpush2.msra.mxu0 0.0
        %946 = vmatprep.subr.mxu0 0.0
        %947 = vmatpush2.msra.mxu0 0.0
        %948 = vmatprep.subr.mxu0 0.0
        %949 = vmatpush2.msra.mxu0 0.0
        %950 = vmatprep.subr.mxu0 0.0
        %951 = vmatpush2.msra.mxu0 0.0
        %952 = vmatprep.subr.mxu0 0.0
        %953 = vmatpush2.msra.mxu0 0.0
        %954 = vmatprep.subr.mxu0 0.0
        %955 = vmatpush2.msra.mxu0 0.0
        %956 = vmatprep.subr.mxu0 0.0
        %957 = vmatpush2.msra.mxu0 0.0
        %958 = vmatprep.subr.mxu0 0.0
        %959 = vmatpush2.msra.mxu0 0.0
        %960 = vmatprep.subr.mxu0 0.0
        %961 = vmatpush2.msra.mxu0 0.0
        %962 = vmatprep.subr.mxu0 0.0
        %963 = vmatpush2.msra.mxu0 0.0
        %964 = vmatprep.subr.mxu0 0.0
        %965 = vmatpush2.msra.mxu0 0.0
        %966 = vmatprep.subr.mxu0 0.0
        %967 = vmatpush2.msra.mxu0 0.0
        %968 = vmatprep.subr.mxu0 0.0
        %969 = vmatpush2.msra.mxu0 0.0
        %970 = vmatprep.subr.mxu0 0.0
        %971 = vmatpush2.msra.mxu0 0.0
        %972 = vmatprep.subr.mxu0 0.0
        %973 = vmatpush2.msra.mxu0 0.0
        %974 = vmatprep.mubr.f32.mxu0 0.0
        %v975 = vand.u32 %v494, 4294901760
        %976 = vmatmul.mubr.f32.gmra.mxu0 %v975
        %v977 = vpop.f32.mrf.mxu0
        %v978 = vadd.f32 %v903, %v977
        %v979 = vpop.f32.mrf.mxu0
        %980 = vdwg.mxu0
        %981 = vrot.lane.b32.xlu0 %v492, 96
        %v982 = vpop.permute.xlu0 %981
        %v983 = vsel %vm414, %v982, 0
        %985 = vmatprep.subr.mxu0 0.0
        %986 = vmatpush1.msra.mxu0 0.0
        %987 = vmatprep.subr.mxu0 0.0
        %988 = vmatpush1.msra.mxu0 0.0
        %989 = vmatprep.subr.mxu0 0.0
        %990 = vmatpush1.msra.mxu0 0.0
        %991 = vmatprep.subr.mxu0 0.0
        %992 = vmatpush1.msra.mxu0 0.0
        %993 = vmatprep.subr.mxu0 0.0
        %994 = vmatpush1.msra.mxu0 0.0
        %995 = vmatprep.subr.mxu0 0.0
        %996 = vmatpush1.msra.mxu0 0.0
        %997 = vmatprep.subr.mxu0 0.0
        %998 = vmatpush1.msra.mxu0 0.0
        %999 = vmatprep.subr.mxu0 0.0
        %1000 = vmatpush1.msra.mxu0 0.0
        %1001 = vmatprep.subr.mxu0 0.0
        %1002 = vmatpush1.msra.mxu0 0.0
        %1003 = vmatprep.subr.mxu0 0.0
        %1004 = vmatpush1.msra.mxu0 0.0
        %1005 = vmatprep.subr.mxu0 0.0
        %1006 = vmatpush1.msra.mxu0 0.0
        %1007 = vmatprep.subr.mxu0 0.0
        %1008 = vmatpush1.msra.mxu0 0.0
        %1009 = vmatprep.subr.mxu0 0.0
        %v1010 = vand.u32 %v491, 4294901760
        %1011 = vmatpush1.msra.mxu0 %v1010
        %1012 = vmatprep.subr.mxu0 0.0
        %v1013 = vand.u32 %v490, 4294901760
        %1014 = vmatpush1.msra.mxu0 %v1013
        %1015 = vmatprep.subr.mxu0 0.0
        %v1016 = vand.u32 %v489, 4294901760
        %1017 = vmatpush1.msra.mxu0 %v1016
        %1018 = vmatprep.subr.mxu0 0.0
        %v1019 = vand.u32 %v488, 4294901760
        %1020 = vmatpush1.msra.mxu0 %v1019
        %1021 = vmatprep.subr.mxu0 0.0
        %1022 = vmatpush2.msra.mxu0 0.0
        %1023 = vmatprep.subr.mxu0 0.0
        %1024 = vmatpush2.msra.mxu0 0.0
        %1025 = vmatprep.subr.mxu0 0.0
        %1026 = vmatpush2.msra.mxu0 0.0
        %1027 = vmatprep.subr.mxu0 0.0
        %1028 = vmatpush2.msra.mxu0 0.0
        %1029 = vmatprep.subr.mxu0 0.0
        %1030 = vmatpush2.msra.mxu0 0.0
        %1031 = vmatprep.subr.mxu0 0.0
        %1032 = vmatpush2.msra.mxu0 0.0
        %1033 = vmatprep.subr.mxu0 0.0
        %1034 = vmatpush2.msra.mxu0 0.0
        %1035 = vmatprep.subr.mxu0 0.0
        %1036 = vmatpush2.msra.mxu0 0.0
        %1037 = vmatprep.subr.mxu0 0.0
        %1038 = vmatpush2.msra.mxu0 0.0
        %1039 = vmatprep.subr.mxu0 0.0
        %1040 = vmatpush2.msra.mxu0 0.0
        %1041 = vmatprep.subr.mxu0 0.0
        %1042 = vmatpush2.msra.mxu0 0.0
        %1043 = vmatprep.subr.mxu0 0.0
        %1044 = vmatpush2.msra.mxu0 0.0
        %1045 = vmatprep.subr.mxu0 0.0
        %1046 = vmatpush2.msra.mxu0 0.0
        %1047 = vmatprep.subr.mxu0 0.0
        %1048 = vmatpush2.msra.mxu0 0.0
        %1049 = vmatprep.subr.mxu0 0.0
        %1050 = vmatpush2.msra.mxu0 0.0
        %1051 = vmatprep.subr.mxu0 0.0
        %1052 = vmatpush2.msra.mxu0 0.0
        %1053 = vmatprep.mubr.f32.mxu0 0.0
        %v1054 = vand.u32 %v983, 4294901760
        %v1055 = vsub.f32 %v983, %v1054
        %v1056 = vand.u32 %v1055, 4294901760
        %v1057 = vsub.f32 %v1055, %v1056
        %v1058 = vand.u32 %v1057, 4294901760
        %1059 = vmatmul.mubr.f32.gmra.mxu0 %v1058
        %v1060 = vpop.f32.mrf.mxu0
        %v1061 = vadd.f32 0.0, %v1060
        %v1062 = vpop.f32.mrf.mxu0
        %1063 = vdwg.mxu0
        %1064 = vmatprep.subr.mxu0 0.0
        %1065 = vmatpush1.msra.mxu0 0.0
        %1066 = vmatprep.subr.mxu0 0.0
        %1067 = vmatpush1.msra.mxu0 0.0
        %1068 = vmatprep.subr.mxu0 0.0
        %1069 = vmatpush1.msra.mxu0 0.0
        %1070 = vmatprep.subr.mxu0 0.0
        %1071 = vmatpush1.msra.mxu0 0.0
        %1072 = vmatprep.subr.mxu0 0.0
        %1073 = vmatpush1.msra.mxu0 0.0
        %1074 = vmatprep.subr.mxu0 0.0
        %1075 = vmatpush1.msra.mxu0 0.0
        %1076 = vmatprep.subr.mxu0 0.0
        %1077 = vmatpush1.msra.mxu0 0.0
        %1078 = vmatprep.subr.mxu0 0.0
        %1079 = vmatpush1.msra.mxu0 0.0
        %1080 = vmatprep.subr.mxu0 0.0
        %1081 = vmatpush1.msra.mxu0 0.0
        %1082 = vmatprep.subr.mxu0 0.0
        %1083 = vmatpush1.msra.mxu0 0.0
        %1084 = vmatprep.subr.mxu0 0.0
        %1085 = vmatpush1.msra.mxu0 0.0
        %1086 = vmatprep.subr.mxu0 0.0
        %1087 = vmatpush1.msra.mxu0 0.0
        %1088 = vmatprep.subr.mxu0 0.0
        %v1089 = vand.u32 %v491, 4294901760
        %v1090 = vsub.f32 %v491, %v1089
        %v1091 = vand.u32 %v1090, 4294901760
        %v1092 = vsub.f32 %v1090, %v1091
        %v1093 = vand.u32 %v1092, 4294901760
        %1094 = vmatpush1.msra.mxu0 %v1093
        %1095 = vmatprep.subr.mxu0 0.0
        %v1096 = vand.u32 %v490, 4294901760
        %v1097 = vsub.f32 %v490, %v1096
        %v1098 = vand.u32 %v1097, 4294901760
        %v1099 = vsub.f32 %v1097, %v1098
        %v1100 = vand.u32 %v1099, 4294901760
        %1101 = vmatpush1.msra.mxu0 %v1100
        %1102 = vmatprep.subr.mxu0 0.0
        %v1103 = vand.u32 %v489, 4294901760
        %v1104 = vsub.f32 %v489, %v1103
        %v1105 = vand.u32 %v1104, 4294901760
        %v1106 = vsub.f32 %v1104, %v1105
        %v1107 = vand.u32 %v1106, 4294901760
        %1108 = vmatpush1.msra.mxu0 %v1107
        %1109 = vmatprep.subr.mxu0 0.0
        %v1110 = vand.u32 %v488, 4294901760
        %v1111 = vsub.f32 %v488, %v1110
        %v1112 = vand.u32 %v1111, 4294901760
        %v1113 = vsub.f32 %v1111, %v1112
        %v1114 = vand.u32 %v1113, 4294901760
        %1115 = vmatpush1.msra.mxu0 %v1114
        %1116 = vmatprep.subr.mxu0 0.0
        %1117 = vmatpush2.msra.mxu0 0.0
        %1118 = vmatprep.subr.mxu0 0.0
        %1119 = vmatpush2.msra.mxu0 0.0
        %1120 = vmatprep.subr.mxu0 0.0
        %1121 = vmatpush2.msra.mxu0 0.0
        %1122 = vmatprep.subr.mxu0 0.0
        %1123 = vmatpush2.msra.mxu0 0.0
        %1124 = vmatprep.subr.mxu0 0.0
        %1125 = vmatpush2.msra.mxu0 0.0
        %1126 = vmatprep.subr.mxu0 0.0
        %1127 = vmatpush2.msra.mxu0 0.0
        %1128 = vmatprep.subr.mxu0 0.0
        %1129 = vmatpush2.msra.mxu0 0.0
        %1130 = vmatprep.subr.mxu0 0.0
        %1131 = vmatpush2.msra.mxu0 0.0
        %1132 = vmatprep.subr.mxu0 0.0
        %1133 = vmatpush2.msra.mxu0 0.0
        %1134 = vmatprep.subr.mxu0 0.0
        %1135 = vmatpush2.msra.mxu0 0.0
        %1136 = vmatprep.subr.mxu0 0.0
        %1137 = vmatpush2.msra.mxu0 0.0
        %1138 = vmatprep.subr.mxu0 0.0
        %1139 = vmatpush2.msra.mxu0 0.0
        %1140 = vmatprep.subr.mxu0 0.0
        %1141 = vmatpush2.msra.mxu0 0.0
        %1142 = vmatprep.subr.mxu0 0.0
        %1143 = vmatpush2.msra.mxu0 0.0
        %1144 = vmatprep.subr.mxu0 0.0
        %1145 = vmatpush2.msra.mxu0 0.0
        %1146 = vmatprep.subr.mxu0 0.0
        %1147 = vmatpush2.msra.mxu0 0.0
        %1148 = vmatprep.mubr.f32.mxu0 0.0
        %v1149 = vand.u32 %v983, 4294901760
        %1150 = vmatmul.mubr.f32.gmra.mxu0 %v1149
        %v1151 = vpop.f32.mrf.mxu0
        %v1152 = vadd.f32 %v1061, %v1151
        %v1153 = vpop.f32.mrf.mxu0
        %1154 = vdwg.mxu0
        %1155 = vmatprep.subr.mxu0 0.0
        %1156 = vmatpush1.msra.mxu0 0.0
        %1157 = vmatprep.subr.mxu0 0.0
        %1158 = vmatpush1.msra.mxu0 0.0
        %1159 = vmatprep.subr.mxu0 0.0
        %1160 = vmatpush1.msra.mxu0 0.0
        %1161 = vmatprep.subr.mxu0 0.0
        %1162 = vmatpush1.msra.mxu0 0.0
        %1163 = vmatprep.subr.mxu0 0.0
        %1164 = vmatpush1.msra.mxu0 0.0
        %1165 = vmatprep.subr.mxu0 0.0
        %1166 = vmatpush1.msra.mxu0 0.0
        %1167 = vmatprep.subr.mxu0 0.0
        %1168 = vmatpush1.msra.mxu0 0.0
        %1169 = vmatprep.subr.mxu0 0.0
        %1170 = vmatpush1.msra.mxu0 0.0
        %1171 = vmatprep.subr.mxu0 0.0
        %1172 = vmatpush1.msra.mxu0 0.0
        %1173 = vmatprep.subr.mxu0 0.0
        %1174 = vmatpush1.msra.mxu0 0.0
        %1175 = vmatprep.subr.mxu0 0.0
        %1176 = vmatpush1.msra.mxu0 0.0
        %1177 = vmatprep.subr.mxu0 0.0
        %1178 = vmatpush1.msra.mxu0 0.0
        %1179 = vmatprep.subr.mxu0 0.0
        %v1180 = vand.u32 %v491, 4294901760
        %v1181 = vsub.f32 %v491, %v1180
        %1182 = vmatpush1.msra.mxu0 %v1181
        %1183 = vmatprep.subr.mxu0 0.0
        %v1184 = vand.u32 %v490, 4294901760
        %v1185 = vsub.f32 %v490, %v1184
        %1186 = vmatpush1.msra.mxu0 %v1185
        %1187 = vmatprep.subr.mxu0 0.0
        %v1188 = vand.u32 %v489, 4294901760
        %v1189 = vsub.f32 %v489, %v1188
        %1190 = vmatpush1.msra.mxu0 %v1189
        %1191 = vmatprep.subr.mxu0 0.0
        %v1192 = vand.u32 %v488, 4294901760
        %v1193 = vsub.f32 %v488, %v1192
        %1194 = vmatpush1.msra.mxu0 %v1193
        %1195 = vmatprep.subr.mxu0 0.0
        %1196 = vmatpush2.msra.mxu0 0.0
        %1197 = vmatprep.subr.mxu0 0.0
        %1198 = vmatpush2.msra.mxu0 0.0
        %1199 = vmatprep.subr.mxu0 0.0
        %1200 = vmatpush2.msra.mxu0 0.0
        %1201 = vmatprep.subr.mxu0 0.0
        %1202 = vmatpush2.msra.mxu0 0.0
        %1203 = vmatprep.subr.mxu0 0.0
        %1204 = vmatpush2.msra.mxu0 0.0
        %1205 = vmatprep.subr.mxu0 0.0
        %1206 = vmatpush2.msra.mxu0 0.0
        %1207 = vmatprep.subr.mxu0 0.0
        %1208 = vmatpush2.msra.mxu0 0.0
        %1209 = vmatprep.subr.mxu0 0.0
        %1210 = vmatpush2.msra.mxu0 0.0
        %1211 = vmatprep.subr.mxu0 0.0
        %1212 = vmatpush2.msra.mxu0 0.0
        %1213 = vmatprep.subr.mxu0 0.0
        %1214 = vmatpush2.msra.mxu0 0.0
        %1215 = vmatprep.subr.mxu0 0.0
        %1216 = vmatpush2.msra.mxu0 0.0
        %1217 = vmatprep.subr.mxu0 0.0
        %1218 = vmatpush2.msra.mxu0 0.0
        %1219 = vmatprep.subr.mxu0 0.0
        %1220 = vmatpush2.msra.mxu0 0.0
        %1221 = vmatprep.subr.mxu0 0.0
        %1222 = vmatpush2.msra.mxu0 0.0
        %1223 = vmatprep.subr.mxu0 0.0
        %1224 = vmatpush2.msra.mxu0 0.0
        %1225 = vmatprep.subr.mxu0 0.0
        %1226 = vmatpush2.msra.mxu0 0.0
        %1227 = vmatprep.mubr.f32.mxu0 0.0
        %v1228 = vand.u32 %v983, 4294901760
        %v1229 = vsub.f32 %v983, %v1228
        %1230 = vmatmul.mubr.f32.gmra.mxu0 %v1229
        %v1231 = vpop.f32.mrf.mxu0
        %v1232 = vadd.f32 %v1152, %v1231
        %v1233 = vpop.f32.mrf.mxu0
        %1234 = vdwg.mxu0
        %1235 = vmatprep.subr.mxu0 0.0
        %1236 = vmatpush1.msra.mxu0 0.0
        %1237 = vmatprep.subr.mxu0 0.0
        %1238 = vmatpush1.msra.mxu0 0.0
        %1239 = vmatprep.subr.mxu0 0.0
        %1240 = vmatpush1.msra.mxu0 0.0
        %1241 = vmatprep.subr.mxu0 0.0
        %1242 = vmatpush1.msra.mxu0 0.0
        %1243 = vmatprep.subr.mxu0 0.0
        %1244 = vmatpush1.msra.mxu0 0.0
        %1245 = vmatprep.subr.mxu0 0.0
        %1246 = vmatpush1.msra.mxu0 0.0
        %1247 = vmatprep.subr.mxu0 0.0
        %1248 = vmatpush1.msra.mxu0 0.0
        %1249 = vmatprep.subr.mxu0 0.0
        %1250 = vmatpush1.msra.mxu0 0.0
        %1251 = vmatprep.subr.mxu0 0.0
        %1252 = vmatpush1.msra.mxu0 0.0
        %1253 = vmatprep.subr.mxu0 0.0
        %1254 = vmatpush1.msra.mxu0 0.0
        %1255 = vmatprep.subr.mxu0 0.0
        %1256 = vmatpush1.msra.mxu0 0.0
        %1257 = vmatprep.subr.mxu0 0.0
        %1258 = vmatpush1.msra.mxu0 0.0
        %1259 = vmatprep.subr.mxu0 0.0
        %v1260 = vand.u32 %v491, 4294901760
        %1261 = vmatpush1.msra.mxu0 %v1260
        %1262 = vmatprep.subr.mxu0 0.0
        %v1263 = vand.u32 %v490, 4294901760
        %1264 = vmatpush1.msra.mxu0 %v1263
        %1265 = vmatprep.subr.mxu0 0.0
        %v1266 = vand.u32 %v489, 4294901760
        %1267 = vmatpush1.msra.mxu0 %v1266
        %1268 = vmatprep.subr.mxu0 0.0
        %v1269 = vand.u32 %v488, 4294901760
        %1270 = vmatpush1.msra.mxu0 %v1269
        %1271 = vmatprep.subr.mxu0 0.0
        %1272 = vmatpush2.msra.mxu0 0.0
        %1273 = vmatprep.subr.mxu0 0.0
        %1274 = vmatpush2.msra.mxu0 0.0
        %1275 = vmatprep.subr.mxu0 0.0
        %1276 = vmatpush2.msra.mxu0 0.0
        %1277 = vmatprep.subr.mxu0 0.0
        %1278 = vmatpush2.msra.mxu0 0.0
        %1279 = vmatprep.subr.mxu0 0.0
        %1280 = vmatpush2.msra.mxu0 0.0
        %1281 = vmatprep.subr.mxu0 0.0
        %1282 = vmatpush2.msra.mxu0 0.0
        %1283 = vmatprep.subr.mxu0 0.0
        %1284 = vmatpush2.msra.mxu0 0.0
        %1285 = vmatprep.subr.mxu0 0.0
        %1286 = vmatpush2.msra.mxu0 0.0
        %1287 = vmatprep.subr.mxu0 0.0
        %1288 = vmatpush2.msra.mxu0 0.0
        %1289 = vmatprep.subr.mxu0 0.0
        %1290 = vmatpush2.msra.mxu0 0.0
        %1291 = vmatprep.subr.mxu0 0.0
        %1292 = vmatpush2.msra.mxu0 0.0
        %1293 = vmatprep.subr.mxu0 0.0
        %1294 = vmatpush2.msra.mxu0 0.0
        %1295 = vmatprep.subr.mxu0 0.0
        %1296 = vmatpush2.msra.mxu0 0.0
        %1297 = vmatprep.subr.mxu0 0.0
        %1298 = vmatpush2.msra.mxu0 0.0
        %1299 = vmatprep.subr.mxu0 0.0
        %1300 = vmatpush2.msra.mxu0 0.0
        %1301 = vmatprep.subr.mxu0 0.0
        %1302 = vmatpush2.msra.mxu0 0.0
        %1303 = vmatprep.mubr.f32.mxu0 0.0
        %v1304 = vand.u32 %v983, 4294901760
        %v1305 = vsub.f32 %v983, %v1304
        %v1306 = vand.u32 %v1305, 4294901760
        %1307 = vmatmul.mubr.f32.gmra.mxu0 %v1306
        %v1308 = vpop.f32.mrf.mxu0
        %v1309 = vadd.f32 %v1232, %v1308
        %v1310 = vpop.f32.mrf.mxu0
        %1311 = vdwg.mxu0
        %1312 = vmatprep.subr.mxu0 0.0
        %1313 = vmatpush1.msra.mxu0 0.0
        %1314 = vmatprep.subr.mxu0 0.0
        %1315 = vmatpush1.msra.mxu0 0.0
        %1316 = vmatprep.subr.mxu0 0.0
        %1317 = vmatpush1.msra.mxu0 0.0
        %1318 = vmatprep.subr.mxu0 0.0
        %1319 = vmatpush1.msra.mxu0 0.0
        %1320 = vmatprep.subr.mxu0 0.0
        %1321 = vmatpush1.msra.mxu0 0.0
        %1322 = vmatprep.subr.mxu0 0.0
        %1323 = vmatpush1.msra.mxu0 0.0
        %1324 = vmatprep.subr.mxu0 0.0
        %1325 = vmatpush1.msra.mxu0 0.0
        %1326 = vmatprep.subr.mxu0 0.0
        %1327 = vmatpush1.msra.mxu0 0.0
        %1328 = vmatprep.subr.mxu0 0.0
        %1329 = vmatpush1.msra.mxu0 0.0
        %1330 = vmatprep.subr.mxu0 0.0
        %1331 = vmatpush1.msra.mxu0 0.0
        %1332 = vmatprep.subr.mxu0 0.0
        %1333 = vmatpush1.msra.mxu0 0.0
        %1334 = vmatprep.subr.mxu0 0.0
        %1335 = vmatpush1.msra.mxu0 0.0
        %1336 = vmatprep.subr.mxu0 0.0
        %v1337 = vand.u32 %v491, 4294901760
        %v1338 = vsub.f32 %v491, %v1337
        %v1339 = vand.u32 %v1338, 4294901760
        %1340 = vmatpush1.msra.mxu0 %v1339
        %1341 = vmatprep.subr.mxu0 0.0
        %v1342 = vand.u32 %v490, 4294901760
        %v1343 = vsub.f32 %v490, %v1342
        %v1344 = vand.u32 %v1343, 4294901760
        %1345 = vmatpush1.msra.mxu0 %v1344
        %1346 = vmatprep.subr.mxu0 0.0
        %v1347 = vand.u32 %v489, 4294901760
        %v1348 = vsub.f32 %v489, %v1347
        %v1349 = vand.u32 %v1348, 4294901760
        %1350 = vmatpush1.msra.mxu0 %v1349
        %1351 = vmatprep.subr.mxu0 0.0
        %v1352 = vand.u32 %v488, 4294901760
        %v1353 = vsub.f32 %v488, %v1352
        %v1354 = vand.u32 %v1353, 4294901760
        %1355 = vmatpush1.msra.mxu0 %v1354
        %1356 = vmatprep.subr.mxu0 0.0
        %1357 = vmatpush2.msra.mxu0 0.0
        %1358 = vmatprep.subr.mxu0 0.0
        %1359 = vmatpush2.msra.mxu0 0.0
        %1360 = vmatprep.subr.mxu0 0.0
        %1361 = vmatpush2.msra.mxu0 0.0
        %1362 = vmatprep.subr.mxu0 0.0
        %1363 = vmatpush2.msra.mxu0 0.0
        %1364 = vmatprep.subr.mxu0 0.0
        %1365 = vmatpush2.msra.mxu0 0.0
        %1366 = vmatprep.subr.mxu0 0.0
        %1367 = vmatpush2.msra.mxu0 0.0
        %1368 = vmatprep.subr.mxu0 0.0
        %1369 = vmatpush2.msra.mxu0 0.0
        %1370 = vmatprep.subr.mxu0 0.0
        %1371 = vmatpush2.msra.mxu0 0.0
        %1372 = vmatprep.subr.mxu0 0.0
        %1373 = vmatpush2.msra.mxu0 0.0
        %1374 = vmatprep.subr.mxu0 0.0
        %1375 = vmatpush2.msra.mxu0 0.0
        %1376 = vmatprep.subr.mxu0 0.0
        %1377 = vmatpush2.msra.mxu0 0.0
        %1378 = vmatprep.subr.mxu0 0.0
        %1379 = vmatpush2.msra.mxu0 0.0
        %1380 = vmatprep.subr.mxu0 0.0
        %1381 = vmatpush2.msra.mxu0 0.0
        %1382 = vmatprep.subr.mxu0 0.0
        %1383 = vmatpush2.msra.mxu0 0.0
        %1384 = vmatprep.subr.mxu0 0.0
        %1385 = vmatpush2.msra.mxu0 0.0
        %1386 = vmatprep.subr.mxu0 0.0
        %1387 = vmatpush2.msra.mxu0 0.0
        %1388 = vmatprep.mubr.f32.mxu0 0.0
        %v1389 = vand.u32 %v983, 4294901760
        %1390 = vmatmul.mubr.f32.gmra.mxu0 %v1389
        %v1391 = vpop.f32.mrf.mxu0
        %v1392 = vadd.f32 %v1309, %v1391
        %v1393 = vpop.f32.mrf.mxu0
        %1394 = vdwg.mxu0
        %1395 = vmatprep.subr.mxu0 0.0
        %1396 = vmatpush1.msra.mxu0 0.0
        %1397 = vmatprep.subr.mxu0 0.0
        %1398 = vmatpush1.msra.mxu0 0.0
        %1399 = vmatprep.subr.mxu0 0.0
        %1400 = vmatpush1.msra.mxu0 0.0
        %1401 = vmatprep.subr.mxu0 0.0
        %1402 = vmatpush1.msra.mxu0 0.0
        %1403 = vmatprep.subr.mxu0 0.0
        %1404 = vmatpush1.msra.mxu0 0.0
        %1405 = vmatprep.subr.mxu0 0.0
        %1406 = vmatpush1.msra.mxu0 0.0
        %1407 = vmatprep.subr.mxu0 0.0
        %1408 = vmatpush1.msra.mxu0 0.0
        %1409 = vmatprep.subr.mxu0 0.0
        %1410 = vmatpush1.msra.mxu0 0.0
        %1411 = vmatprep.subr.mxu0 0.0
        %1412 = vmatpush1.msra.mxu0 0.0
        %1413 = vmatprep.subr.mxu0 0.0
        %1414 = vmatpush1.msra.mxu0 0.0
        %1415 = vmatprep.subr.mxu0 0.0
        %1416 = vmatpush1.msra.mxu0 0.0
        %1417 = vmatprep.subr.mxu0 0.0
        %1418 = vmatpush1.msra.mxu0 0.0
        %1419 = vmatprep.subr.mxu0 0.0
        %v1420 = vand.u32 %v491, 4294901760
        %1421 = vmatpush1.msra.mxu0 %v1420
        %1422 = vmatprep.subr.mxu0 0.0
        %v1423 = vand.u32 %v490, 4294901760
        %1424 = vmatpush1.msra.mxu0 %v1423
        %1425 = vmatprep.subr.mxu0 0.0
        %v1426 = vand.u32 %v489, 4294901760
        %1427 = vmatpush1.msra.mxu0 %v1426
        %1428 = vmatprep.subr.mxu0 0.0
        %v1429 = vand.u32 %v488, 4294901760
        %1430 = vmatpush1.msra.mxu0 %v1429
        %1431 = vmatprep.subr.mxu0 0.0
        %1432 = vmatpush2.msra.mxu0 0.0
        %1433 = vmatprep.subr.mxu0 0.0
        %1434 = vmatpush2.msra.mxu0 0.0
        %1435 = vmatprep.subr.mxu0 0.0
        %1436 = vmatpush2.msra.mxu0 0.0
        %1437 = vmatprep.subr.mxu0 0.0
        %1438 = vmatpush2.msra.mxu0 0.0
        %1439 = vmatprep.subr.mxu0 0.0
        %1440 = vmatpush2.msra.mxu0 0.0
        %1441 = vmatprep.subr.mxu0 0.0
        %1442 = vmatpush2.msra.mxu0 0.0
        %1443 = vmatprep.subr.mxu0 0.0
        %1444 = vmatpush2.msra.mxu0 0.0
        %1445 = vmatprep.subr.mxu0 0.0
        %1446 = vmatpush2.msra.mxu0 0.0
        %1447 = vmatprep.subr.mxu0 0.0
        %1448 = vmatpush2.msra.mxu0 0.0
        %1449 = vmatprep.subr.mxu0 0.0
        %1450 = vmatpush2.msra.mxu0 0.0
        %1451 = vmatprep.subr.mxu0 0.0
        %1452 = vmatpush2.msra.mxu0 0.0
        %1453 = vmatprep.subr.mxu0 0.0
        %1454 = vmatpush2.msra.mxu0 0.0
        %1455 = vmatprep.subr.mxu0 0.0
        %1456 = vmatpush2.msra.mxu0 0.0
        %1457 = vmatprep.subr.mxu0 0.0
        %1458 = vmatpush2.msra.mxu0 0.0
        %1459 = vmatprep.subr.mxu0 0.0
        %1460 = vmatpush2.msra.mxu0 0.0
        %1461 = vmatprep.subr.mxu0 0.0
        %1462 = vmatpush2.msra.mxu0 0.0
        %1463 = vmatprep.mubr.f32.mxu0 0.0
        %v1464 = vand.u32 %v983, 4294901760
        %1465 = vmatmul.mubr.f32.gmra.mxu0 %v1464
        %v1466 = vpop.f32.mrf.mxu0
        %v1467 = vadd.f32 %v1392, %v1466
        %v1468 = vpop.f32.mrf.mxu0
        %1469 = vdwg.mxu0
        %v1470 = vrsqrt.pop %v978
        %v1471 = vmul.f32 %v978, %v1470
        %vm1472 = vcmp.eq.f32.partialorder %v978, inf
        %v1473 = vsel %vm1472, %v978, %v1471
        %vm1474 = vcmp.eq.f32.partialorder %v978, 0.0
        %v1475 = vand.u32 %v978, 2147483648
        %v1476 = vsel %vm1474, %v1475, %v1473
        %v1477 = vadd.f32 %v1476, 1e-06
        %v1478 = vrcp.pop %v1477
        %v1479 = vmul.f32 1.0, %v1478
        %v1480 = vmul.f32 %v485, %v1479
        %v1481 = vrsqrt.pop %v1467
        %v1482 = vmul.f32 %v1467, %v1481
        %vm1483 = vcmp.eq.f32.partialorder %v1467, inf
        %v1484 = vsel %vm1483, %v1467, %v1482
        %vm1485 = vcmp.eq.f32.partialorder %v1467, 0.0
        %v1486 = vand.u32 %v1467, 2147483648
        %v1487 = vsel %vm1485, %v1486, %v1484
        %v1488 = vadd.f32 %v1487, 1e-06
        %v1489 = vrcp.pop %v1488
        %v1490 = vmul.f32 1.0, %v1489
        %1492 = vrot.lane.b32.xlu0 %v1490, 32
        %v1493 = vpop.permute.xlu0 %1492
        %v1495 = vmul.f32 %v485, %v1493
        %1497 = vrot.lane.b32.xlu0 %v402, 64
        %v1498 = vpop.permute.xlu0 %1497
        %v1500 = vmul.f32 %v485, %v1498
        %v1501 = vld [vmem:[%s7] sm:$0x3]
        %v1504 = vunpack.c.l.s4 1966171168
        %v1505 = vunpack.c.0.s8 %v1504
        %v1506 = vlaneseq
        %v1507 = vshrl.u32 %v1506, 7
        %v1508 = vsub.s32 %v1505, %v1507
        %v1509 = vrot.slane %v1501, %v1508
        %v1510 = vcombine.high %v1509, %v1509
        %v1512 = vunpack.c.l.s4 1966171168
        %v1513 = vunpack.c.0.s8 %v1512
        %v1514 = vlaneseq
        %v1515 = vshrl.u32 %v1514, 7
        %v1516 = vsub.s32 %v1513, %v1515
        %v1517 = vrot.slane %v1509, %v1516
        %v1519 = vunpack.c.l.s4 1966171168
        %v1520 = vunpack.c.0.s8 %v1519
        %v1521 = vlaneseq
        %v1522 = vshrl.u32 %v1521, 7
        %v1523 = vsub.s32 %v1520, %v1522
        %v1524 = vrot.slane %v1510, %v1523
        %v1525 = vlaneseq
        %v1526 = vshrl.u32 %v1525, 7
        %v1527 = vsub.s32 0, %v1526
        %v1528 = vrot.slane %v1517, %v1527
        %v1529 = vlaneseq
        %v1530 = vshrl.u32 %v1529, 7
        %v1531 = vsub.s32 0, %v1530
        %v1532 = vrot.slane %v1524, %v1531
        %v1535 = vmul.f32 %v1480, %v1528
        %v1536 = vmul.f32 %v1480, %v1532
        %1537 = vrot.lane.b32.xlu0 %v1528, 64
        %v1538 = vpop.permute.xlu0 %1537
        %1539 = vrot.lane.b32.xlu0 %v1532, 64
        %v1540 = vpop.permute.xlu0 %1539
        %v1543 = vmul.f32 %v1500, %v1538
        %v1544 = vmul.f32 %v1500, %v1540
        %1546 = vrot.lane.b32.xlu0 %v1495, 96
        %v1547 = vpop.permute.xlu0 %1546
        %v1549 = vsel %vm414, %v1535, 0
        %v1551 = vsel %vm414, %v1547, 0
        %1553 = vmatprep.subr.mxu0 0.0
        %1554 = vmatpush1.xpose.msra.mxu0 0.0
        %1555 = vmatprep.subr.mxu0 0.0
        %1556 = vmatpush1.xpose.msra.mxu0 0.0
        %1557 = vmatprep.subr.mxu0 0.0
        %1558 = vmatpush1.xpose.msra.mxu0 0.0
        %1559 = vmatprep.subr.mxu0 0.0
        %1560 = vmatpush1.xpose.msra.mxu0 0.0
        %1561 = vmatprep.subr.mxu0 0.0
        %1562 = vmatpush1.xpose.msra.mxu0 0.0
        %1563 = vmatprep.subr.mxu0 0.0
        %1564 = vmatpush1.xpose.msra.mxu0 0.0
        %1565 = vmatprep.subr.mxu0 0.0
        %1566 = vmatpush1.xpose.msra.mxu0 0.0
        %1567 = vmatprep.subr.mxu0 0.0
        %1568 = vmatpush1.xpose.msra.mxu0 0.0
        %1569 = vmatprep.subr.mxu0 0.0
        %1570 = vmatpush1.xpose.msra.mxu0 0.0
        %1571 = vmatprep.subr.mxu0 0.0
        %1572 = vmatpush1.xpose.msra.mxu0 0.0
        %1573 = vmatprep.subr.mxu0 0.0
        %1574 = vmatpush1.xpose.msra.mxu0 0.0
        %1575 = vmatprep.subr.mxu0 0.0
        %1576 = vmatpush1.xpose.msra.mxu0 0.0
        %1577 = vmatprep.subr.mxu0 0.0
        %1578 = vmatpush1.xpose.msra.mxu0 0.0
        %1579 = vmatprep.subr.mxu0 0.0
        %1580 = vmatpush1.xpose.msra.mxu0 0.0
        %1581 = vmatprep.subr.mxu0 0.0
        %1582 = vmatpush1.xpose.msra.mxu0 0.0
        %1583 = vmatprep.subr.mxu0 0.0
        %v1584 = vand.u32 %v1551, 4294901760
        %1585 = vmatpush1.xpose.msra.mxu0 %v1584
        %1586 = vmatprep.subr.mxu0 0.0
        %1587 = vmatpush2.xpose.msra.mxu0 0.0
        %1588 = vmatprep.subr.mxu0 0.0
        %1589 = vmatpush2.xpose.msra.mxu0 0.0
        %1590 = vmatprep.subr.mxu0 0.0
        %1591 = vmatpush2.xpose.msra.mxu0 0.0
        %1592 = vmatprep.subr.mxu0 0.0
        %1593 = vmatpush2.xpose.msra.mxu0 0.0
        %1594 = vmatprep.subr.mxu0 0.0
        %1595 = vmatpush2.xpose.msra.mxu0 0.0
        %1596 = vmatprep.subr.mxu0 0.0
        %1597 = vmatpush2.xpose.msra.mxu0 0.0
        %1598 = vmatprep.subr.mxu0 0.0
        %1599 = vmatpush2.xpose.msra.mxu0 0.0
        %1600 = vmatprep.subr.mxu0 0.0
        %1601 = vmatpush2.xpose.msra.mxu0 0.0
        %1602 = vmatprep.subr.mxu0 0.0
        %1603 = vmatpush2.xpose.msra.mxu0 0.0
        %1604 = vmatprep.subr.mxu0 0.0
        %1605 = vmatpush2.xpose.msra.mxu0 0.0
        %1606 = vmatprep.subr.mxu0 0.0
        %1607 = vmatpush2.xpose.msra.mxu0 0.0
        %1608 = vmatprep.subr.mxu0 0.0
        %1609 = vmatpush2.xpose.msra.mxu0 0.0
        %1610 = vmatprep.subr.mxu0 0.0
        %1611 = vmatpush2.xpose.msra.mxu0 0.0
        %1612 = vmatprep.subr.mxu0 0.0
        %1613 = vmatpush2.xpose.msra.mxu0 0.0
        %1614 = vmatprep.subr.mxu0 0.0
        %1615 = vmatpush2.xpose.msra.mxu0 0.0
        %1616 = vmatprep.subr.mxu0 0.0
        %1617 = vmatpush2.xpose.msra.mxu0 0.0
        %1618 = vmatprep.mubr.f32.mxu0 0.0
        %v1619 = vand.u32 %v1549, 4294901760
        %v1620 = vsub.f32 %v1549, %v1619
        %v1621 = vand.u32 %v1620, 4294901760
        %v1622 = vsub.f32 %v1620, %v1621
        %v1623 = vand.u32 %v1622, 4294901760
        %1624 = vmatmul.mubr.f32.gmra.mxu0 %v1623
        %v1625 = vpop.f32.mrf.mxu0
        %v1626 = vadd.f32 0.0, %v1625
        %v1627 = vpop.f32.mrf.mxu0
        %1628 = vdwg.mxu0
        %1629 = vmatprep.subr.mxu0 0.0
        %1630 = vmatpush1.xpose.msra.mxu0 0.0
        %1631 = vmatprep.subr.mxu0 0.0
        %1632 = vmatpush1.xpose.msra.mxu0 0.0
        %1633 = vmatprep.subr.mxu0 0.0
        %1634 = vmatpush1.xpose.msra.mxu0 0.0
        %1635 = vmatprep.subr.mxu0 0.0
        %1636 = vmatpush1.xpose.msra.mxu0 0.0
        %1637 = vmatprep.subr.mxu0 0.0
        %1638 = vmatpush1.xpose.msra.mxu0 0.0
        %1639 = vmatprep.subr.mxu0 0.0
        %1640 = vmatpush1.xpose.msra.mxu0 0.0
        %1641 = vmatprep.subr.mxu0 0.0
        %1642 = vmatpush1.xpose.msra.mxu0 0.0
        %1643 = vmatprep.subr.mxu0 0.0
        %1644 = vmatpush1.xpose.msra.mxu0 0.0
        %1645 = vmatprep.subr.mxu0 0.0
        %1646 = vmatpush1.xpose.msra.mxu0 0.0
        %1647 = vmatprep.subr.mxu0 0.0
        %1648 = vmatpush1.xpose.msra.mxu0 0.0
        %1649 = vmatprep.subr.mxu0 0.0
        %1650 = vmatpush1.xpose.msra.mxu0 0.0
        %1651 = vmatprep.subr.mxu0 0.0
        %1652 = vmatpush1.xpose.msra.mxu0 0.0
        %1653 = vmatprep.subr.mxu0 0.0
        %1654 = vmatpush1.xpose.msra.mxu0 0.0
        %1655 = vmatprep.subr.mxu0 0.0
        %1656 = vmatpush1.xpose.msra.mxu0 0.0
        %1657 = vmatprep.subr.mxu0 0.0
        %1658 = vmatpush1.xpose.msra.mxu0 0.0
        %1659 = vmatprep.subr.mxu0 0.0
        %v1660 = vand.u32 %v1551, 4294901760
        %v1661 = vsub.f32 %v1551, %v1660
        %v1662 = vand.u32 %v1661, 4294901760
        %v1663 = vsub.f32 %v1661, %v1662
        %v1664 = vand.u32 %v1663, 4294901760
        %1665 = vmatpush1.xpose.msra.mxu0 %v1664
        %1666 = vmatprep.subr.mxu0 0.0
        %1667 = vmatpush2.xpose.msra.mxu0 0.0
        %1668 = vmatprep.subr.mxu0 0.0
        %1669 = vmatpush2.xpose.msra.mxu0 0.0
        %1670 = vmatprep.subr.mxu0 0.0
        %1671 = vmatpush2.xpose.msra.mxu0 0.0
        %1672 = vmatprep.subr.mxu0 0.0
        %1673 = vmatpush2.xpose.msra.mxu0 0.0
        %1674 = vmatprep.subr.mxu0 0.0
        %1675 = vmatpush2.xpose.msra.mxu0 0.0
        %1676 = vmatprep.subr.mxu0 0.0
        %1677 = vmatpush2.xpose.msra.mxu0 0.0
        %1678 = vmatprep.subr.mxu0 0.0
        %1679 = vmatpush2.xpose.msra.mxu0 0.0
        %1680 = vmatprep.subr.mxu0 0.0
        %1681 = vmatpush2.xpose.msra.mxu0 0.0
        %1682 = vmatprep.subr.mxu0 0.0
        %1683 = vmatpush2.xpose.msra.mxu0 0.0
        %1684 = vmatprep.subr.mxu0 0.0
        %1685 = vmatpush2.xpose.msra.mxu0 0.0
        %1686 = vmatprep.subr.mxu0 0.0
        %1687 = vmatpush2.xpose.msra.mxu0 0.0
        %1688 = vmatprep.subr.mxu0 0.0
        %1689 = vmatpush2.xpose.msra.mxu0 0.0
        %1690 = vmatprep.subr.mxu0 0.0
        %1691 = vmatpush2.xpose.msra.mxu0 0.0
        %1692 = vmatprep.subr.mxu0 0.0
        %1693 = vmatpush2.xpose.msra.mxu0 0.0
        %1694 = vmatprep.subr.mxu0 0.0
        %1695 = vmatpush2.xpose.msra.mxu0 0.0
        %1696 = vmatprep.subr.mxu0 0.0
        %1697 = vmatpush2.xpose.msra.mxu0 0.0
        %1698 = vmatprep.mubr.f32.mxu0 0.0
        %v1699 = vand.u32 %v1549, 4294901760
        %1700 = vmatmul.mubr.f32.gmra.mxu0 %v1699
        %v1701 = vpop.f32.mrf.mxu0
        %v1702 = vadd.f32 %v1626, %v1701
        %v1703 = vpop.f32.mrf.mxu0
        %1704 = vdwg.mxu0
        %1705 = vmatprep.subr.mxu0 0.0
        %1706 = vmatpush1.xpose.msra.mxu0 0.0
        %1707 = vmatprep.subr.mxu0 0.0
        %1708 = vmatpush1.xpose.msra.mxu0 0.0
        %1709 = vmatprep.subr.mxu0 0.0
        %1710 = vmatpush1.xpose.msra.mxu0 0.0
        %1711 = vmatprep.subr.mxu0 0.0
        %1712 = vmatpush1.xpose.msra.mxu0 0.0
        %1713 = vmatprep.subr.mxu0 0.0
        %1714 = vmatpush1.xpose.msra.mxu0 0.0
        %1715 = vmatprep.subr.mxu0 0.0
        %1716 = vmatpush1.xpose.msra.mxu0 0.0
        %1717 = vmatprep.subr.mxu0 0.0
        %1718 = vmatpush1.xpose.msra.mxu0 0.0
        %1719 = vmatprep.subr.mxu0 0.0
        %1720 = vmatpush1.xpose.msra.mxu0 0.0
        %1721 = vmatprep.subr.mxu0 0.0
        %1722 = vmatpush1.xpose.msra.mxu0 0.0
        %1723 = vmatprep.subr.mxu0 0.0
        %1724 = vmatpush1.xpose.msra.mxu0 0.0
        %1725 = vmatprep.subr.mxu0 0.0
        %1726 = vmatpush1.xpose.msra.mxu0 0.0
        %1727 = vmatprep.subr.mxu0 0.0
        %1728 = vmatpush1.xpose.msra.mxu0 0.0
        %1729 = vmatprep.subr.mxu0 0.0
        %1730 = vmatpush1.xpose.msra.mxu0 0.0
        %1731 = vmatprep.subr.mxu0 0.0
        %1732 = vmatpush1.xpose.msra.mxu0 0.0
        %1733 = vmatprep.subr.mxu0 0.0
        %1734 = vmatpush1.xpose.msra.mxu0 0.0
        %1735 = vmatprep.subr.mxu0 0.0
        %v1736 = vand.u32 %v1551, 4294901760
        %v1737 = vsub.f32 %v1551, %v1736
        %1738 = vmatpush1.xpose.msra.mxu0 %v1737
        %1739 = vmatprep.subr.mxu0 0.0
        %1740 = vmatpush2.xpose.msra.mxu0 0.0
        %1741 = vmatprep.subr.mxu0 0.0
        %1742 = vmatpush2.xpose.msra.mxu0 0.0
        %1743 = vmatprep.subr.mxu0 0.0
        %1744 = vmatpush2.xpose.msra.mxu0 0.0
        %1745 = vmatprep.subr.mxu0 0.0
        %1746 = vmatpush2.xpose.msra.mxu0 0.0
        %1747 = vmatprep.subr.mxu0 0.0
        %1748 = vmatpush2.xpose.msra.mxu0 0.0
        %1749 = vmatprep.subr.mxu0 0.0
        %1750 = vmatpush2.xpose.msra.mxu0 0.0
        %1751 = vmatprep.subr.mxu0 0.0
        %1752 = vmatpush2.xpose.msra.mxu0 0.0
        %1753 = vmatprep.subr.mxu0 0.0
        %1754 = vmatpush2.xpose.msra.mxu0 0.0
        %1755 = vmatprep.subr.mxu0 0.0
        %1756 = vmatpush2.xpose.msra.mxu0 0.0
        %1757 = vmatprep.subr.mxu0 0.0
        %1758 = vmatpush2.xpose.msra.mxu0 0.0
        %1759 = vmatprep.subr.mxu0 0.0
        %1760 = vmatpush2.xpose.msra.mxu0 0.0
        %1761 = vmatprep.subr.mxu0 0.0
        %1762 = vmatpush2.xpose.msra.mxu0 0.0
        %1763 = vmatprep.subr.mxu0 0.0
        %1764 = vmatpush2.xpose.msra.mxu0 0.0
        %1765 = vmatprep.subr.mxu0 0.0
        %1766 = vmatpush2.xpose.msra.mxu0 0.0
        %1767 = vmatprep.subr.mxu0 0.0
        %1768 = vmatpush2.xpose.msra.mxu0 0.0
        %1769 = vmatprep.subr.mxu0 0.0
        %1770 = vmatpush2.xpose.msra.mxu0 0.0
        %1771 = vmatprep.mubr.f32.mxu0 0.0
        %v1772 = vand.u32 %v1549, 4294901760
        %v1773 = vsub.f32 %v1549, %v1772
        %1774 = vmatmul.mubr.f32.gmra.mxu0 %v1773
        %v1775 = vpop.f32.mrf.mxu0
        %v1776 = vadd.f32 %v1702, %v1775
        %v1777 = vpop.f32.mrf.mxu0
        %1778 = vdwg.mxu0
        %1779 = vmatprep.subr.mxu0 0.0
        %1780 = vmatpush1.xpose.msra.mxu0 0.0
        %1781 = vmatprep.subr.mxu0 0.0
        %1782 = vmatpush1.xpose.msra.mxu0 0.0
        %1783 = vmatprep.subr.mxu0 0.0
        %1784 = vmatpush1.xpose.msra.mxu0 0.0
        %1785 = vmatprep.subr.mxu0 0.0
        %1786 = vmatpush1.xpose.msra.mxu0 0.0
        %1787 = vmatprep.subr.mxu0 0.0
        %1788 = vmatpush1.xpose.msra.mxu0 0.0
        %1789 = vmatprep.subr.mxu0 0.0
        %1790 = vmatpush1.xpose.msra.mxu0 0.0
        %1791 = vmatprep.subr.mxu0 0.0
        %1792 = vmatpush1.xpose.msra.mxu0 0.0
        %1793 = vmatprep.subr.mxu0 0.0
        %1794 = vmatpush1.xpose.msra.mxu0 0.0
        %1795 = vmatprep.subr.mxu0 0.0
        %1796 = vmatpush1.xpose.msra.mxu0 0.0
        %1797 = vmatprep.subr.mxu0 0.0
        %1798 = vmatpush1.xpose.msra.mxu0 0.0
        %1799 = vmatprep.subr.mxu0 0.0
        %1800 = vmatpush1.xpose.msra.mxu0 0.0
        %1801 = vmatprep.subr.mxu0 0.0
        %1802 = vmatpush1.xpose.msra.mxu0 0.0
        %1803 = vmatprep.subr.mxu0 0.0
        %1804 = vmatpush1.xpose.msra.mxu0 0.0
        %1805 = vmatprep.subr.mxu0 0.0
        %1806 = vmatpush1.xpose.msra.mxu0 0.0
        %1807 = vmatprep.subr.mxu0 0.0
        %1808 = vmatpush1.xpose.msra.mxu0 0.0
        %1809 = vmatprep.subr.mxu0 0.0
        %v1810 = vand.u32 %v1551, 4294901760
        %1811 = vmatpush1.xpose.msra.mxu0 %v1810
        %1812 = vmatprep.subr.mxu0 0.0
        %1813 = vmatpush2.xpose.msra.mxu0 0.0
        %1814 = vmatprep.subr.mxu0 0.0
        %1815 = vmatpush2.xpose.msra.mxu0 0.0
        %1816 = vmatprep.subr.mxu0 0.0
        %1817 = vmatpush2.xpose.msra.mxu0 0.0
        %1818 = vmatprep.subr.mxu0 0.0
        %1819 = vmatpush2.xpose.msra.mxu0 0.0
        %1820 = vmatprep.subr.mxu0 0.0
        %1821 = vmatpush2.xpose.msra.mxu0 0.0
        %1822 = vmatprep.subr.mxu0 0.0
        %1823 = vmatpush2.xpose.msra.mxu0 0.0
        %1824 = vmatprep.subr.mxu0 0.0
        %1825 = vmatpush2.xpose.msra.mxu0 0.0
        %1826 = vmatprep.subr.mxu0 0.0
        %1827 = vmatpush2.xpose.msra.mxu0 0.0
        %1828 = vmatprep.subr.mxu0 0.0
        %1829 = vmatpush2.xpose.msra.mxu0 0.0
        %1830 = vmatprep.subr.mxu0 0.0
        %1831 = vmatpush2.xpose.msra.mxu0 0.0
        %1832 = vmatprep.subr.mxu0 0.0
        %1833 = vmatpush2.xpose.msra.mxu0 0.0
        %1834 = vmatprep.subr.mxu0 0.0
        %1835 = vmatpush2.xpose.msra.mxu0 0.0
        %1836 = vmatprep.subr.mxu0 0.0
        %1837 = vmatpush2.xpose.msra.mxu0 0.0
        %1838 = vmatprep.subr.mxu0 0.0
        %1839 = vmatpush2.xpose.msra.mxu0 0.0
        %1840 = vmatprep.subr.mxu0 0.0
        %1841 = vmatpush2.xpose.msra.mxu0 0.0
        %1842 = vmatprep.subr.mxu0 0.0
        %1843 = vmatpush2.xpose.msra.mxu0 0.0
        %1844 = vmatprep.mubr.f32.mxu0 0.0
        %v1845 = vand.u32 %v1549, 4294901760
        %v1846 = vsub.f32 %v1549, %v1845
        %v1847 = vand.u32 %v1846, 4294901760
        %1848 = vmatmul.mubr.f32.gmra.mxu0 %v1847
        %v1849 = vpop.f32.mrf.mxu0
        %v1850 = vadd.f32 %v1776, %v1849
        %v1851 = vpop.f32.mrf.mxu0
        %1852 = vdwg.mxu0
        %1853 = vmatprep.subr.mxu0 0.0
        %1854 = vmatpush1.xpose.msra.mxu0 0.0
        %1855 = vmatprep.subr.mxu0 0.0
        %1856 = vmatpush1.xpose.msra.mxu0 0.0
        %1857 = vmatprep.subr.mxu0 0.0
        %1858 = vmatpush1.xpose.msra.mxu0 0.0
        %1859 = vmatprep.subr.mxu0 0.0
        %1860 = vmatpush1.xpose.msra.mxu0 0.0
        %1861 = vmatprep.subr.mxu0 0.0
        %1862 = vmatpush1.xpose.msra.mxu0 0.0
        %1863 = vmatprep.subr.mxu0 0.0
        %1864 = vmatpush1.xpose.msra.mxu0 0.0
        %1865 = vmatprep.subr.mxu0 0.0
        %1866 = vmatpush1.xpose.msra.mxu0 0.0
        %1867 = vmatprep.subr.mxu0 0.0
        %1868 = vmatpush1.xpose.msra.mxu0 0.0
        %1869 = vmatprep.subr.mxu0 0.0
        %1870 = vmatpush1.xpose.msra.mxu0 0.0
        %1871 = vmatprep.subr.mxu0 0.0
        %1872 = vmatpush1.xpose.msra.mxu0 0.0
        %1873 = vmatprep.subr.mxu0 0.0
        %1874 = vmatpush1.xpose.msra.mxu0 0.0
        %1875 = vmatprep.subr.mxu0 0.0
        %1876 = vmatpush1.xpose.msra.mxu0 0.0
        %1877 = vmatprep.subr.mxu0 0.0
        %1878 = vmatpush1.xpose.msra.mxu0 0.0
        %1879 = vmatprep.subr.mxu0 0.0
        %1880 = vmatpush1.xpose.msra.mxu0 0.0
        %1881 = vmatprep.subr.mxu0 0.0
        %1882 = vmatpush1.xpose.msra.mxu0 0.0
        %1883 = vmatprep.subr.mxu0 0.0
        %v1884 = vand.u32 %v1551, 4294901760
        %v1885 = vsub.f32 %v1551, %v1884
        %v1886 = vand.u32 %v1885, 4294901760
        %1887 = vmatpush1.xpose.msra.mxu0 %v1886
        %1888 = vmatprep.subr.mxu0 0.0
        %1889 = vmatpush2.xpose.msra.mxu0 0.0
        %1890 = vmatprep.subr.mxu0 0.0
        %1891 = vmatpush2.xpose.msra.mxu0 0.0
        %1892 = vmatprep.subr.mxu0 0.0
        %1893 = vmatpush2.xpose.msra.mxu0 0.0
        %1894 = vmatprep.subr.mxu0 0.0
        %1895 = vmatpush2.xpose.msra.mxu0 0.0
        %1896 = vmatprep.subr.mxu0 0.0
        %1897 = vmatpush2.xpose.msra.mxu0 0.0
        %1898 = vmatprep.subr.mxu0 0.0
        %1899 = vmatpush2.xpose.msra.mxu0 0.0
        %1900 = vmatprep.subr.mxu0 0.0
        %1901 = vmatpush2.xpose.msra.mxu0 0.0
        %1902 = vmatprep.subr.mxu0 0.0
        %1903 = vmatpush2.xpose.msra.mxu0 0.0
        %1904 = vmatprep.subr.mxu0 0.0
        %1905 = vmatpush2.xpose.msra.mxu0 0.0
        %1906 = vmatprep.subr.mxu0 0.0
        %1907 = vmatpush2.xpose.msra.mxu0 0.0
        %1908 = vmatprep.subr.mxu0 0.0
        %1909 = vmatpush2.xpose.msra.mxu0 0.0
        %1910 = vmatprep.subr.mxu0 0.0
        %1911 = vmatpush2.xpose.msra.mxu0 0.0
        %1912 = vmatprep.subr.mxu0 0.0
        %1913 = vmatpush2.xpose.msra.mxu0 0.0
        %1914 = vmatprep.subr.mxu0 0.0
        %1915 = vmatpush2.xpose.msra.mxu0 0.0
        %1916 = vmatprep.subr.mxu0 0.0
        %1917 = vmatpush2.xpose.msra.mxu0 0.0
        %1918 = vmatprep.subr.mxu0 0.0
        %1919 = vmatpush2.xpose.msra.mxu0 0.0
        %1920 = vmatprep.mubr.f32.mxu0 0.0
        %v1921 = vand.u32 %v1549, 4294901760
        %1922 = vmatmul.mubr.f32.gmra.mxu0 %v1921
        %v1923 = vpop.f32.mrf.mxu0
        %v1924 = vadd.f32 %v1850, %v1923
        %v1925 = vpop.f32.mrf.mxu0
        %1926 = vdwg.mxu0
        %1927 = vmatprep.subr.mxu0 0.0
        %1928 = vmatpush1.xpose.msra.mxu0 0.0
        %1929 = vmatprep.subr.mxu0 0.0
        %1930 = vmatpush1.xpose.msra.mxu0 0.0
        %1931 = vmatprep.subr.mxu0 0.0
        %1932 = vmatpush1.xpose.msra.mxu0 0.0
        %1933 = vmatprep.subr.mxu0 0.0
        %1934 = vmatpush1.xpose.msra.mxu0 0.0
        %1935 = vmatprep.subr.mxu0 0.0
        %1936 = vmatpush1.xpose.msra.mxu0 0.0
        %1937 = vmatprep.subr.mxu0 0.0
        %1938 = vmatpush1.xpose.msra.mxu0 0.0
        %1939 = vmatprep.subr.mxu0 0.0
        %1940 = vmatpush1.xpose.msra.mxu0 0.0
        %1941 = vmatprep.subr.mxu0 0.0
        %1942 = vmatpush1.xpose.msra.mxu0 0.0
        %1943 = vmatprep.subr.mxu0 0.0
        %1944 = vmatpush1.xpose.msra.mxu0 0.0
        %1945 = vmatprep.subr.mxu0 0.0
        %1946 = vmatpush1.xpose.msra.mxu0 0.0
        %1947 = vmatprep.subr.mxu0 0.0
        %1948 = vmatpush1.xpose.msra.mxu0 0.0
        %1949 = vmatprep.subr.mxu0 0.0
        %1950 = vmatpush1.xpose.msra.mxu0 0.0
        %1951 = vmatprep.subr.mxu0 0.0
        %1952 = vmatpush1.xpose.msra.mxu0 0.0
        %1953 = vmatprep.subr.mxu0 0.0
        %1954 = vmatpush1.xpose.msra.mxu0 0.0
        %1955 = vmatprep.subr.mxu0 0.0
        %1956 = vmatpush1.xpose.msra.mxu0 0.0
        %1957 = vmatprep.subr.mxu0 0.0
        %v1958 = vand.u32 %v1551, 4294901760
        %1959 = vmatpush1.xpose.msra.mxu0 %v1958
        %1960 = vmatprep.subr.mxu0 0.0
        %1961 = vmatpush2.xpose.msra.mxu0 0.0
        %1962 = vmatprep.subr.mxu0 0.0
        %1963 = vmatpush2.xpose.msra.mxu0 0.0
        %1964 = vmatprep.subr.mxu0 0.0
        %1965 = vmatpush2.xpose.msra.mxu0 0.0
        %1966 = vmatprep.subr.mxu0 0.0
        %1967 = vmatpush2.xpose.msra.mxu0 0.0
        %1968 = vmatprep.subr.mxu0 0.0
        %1969 = vmatpush2.xpose.msra.mxu0 0.0
        %1970 = vmatprep.subr.mxu0 0.0
        %1971 = vmatpush2.xpose.msra.mxu0 0.0
        %1972 = vmatprep.subr.mxu0 0.0
        %1973 = vmatpush2.xpose.msra.mxu0 0.0
        %1974 = vmatprep.subr.mxu0 0.0
        %1975 = vmatpush2.xpose.msra.mxu0 0.0
        %1976 = vmatprep.subr.mxu0 0.0
        %1977 = vmatpush2.xpose.msra.mxu0 0.0
        %1978 = vmatprep.subr.mxu0 0.0
        %1979 = vmatpush2.xpose.msra.mxu0 0.0
        %1980 = vmatprep.subr.mxu0 0.0
        %1981 = vmatpush2.xpose.msra.mxu0 0.0
        %1982 = vmatprep.subr.mxu0 0.0
        %1983 = vmatpush2.xpose.msra.mxu0 0.0
        %1984 = vmatprep.subr.mxu0 0.0
        %1985 = vmatpush2.xpose.msra.mxu0 0.0
        %1986 = vmatprep.subr.mxu0 0.0
        %1987 = vmatpush2.xpose.msra.mxu0 0.0
        %1988 = vmatprep.subr.mxu0 0.0
        %1989 = vmatpush2.xpose.msra.mxu0 0.0
        %1990 = vmatprep.subr.mxu0 0.0
        %1991 = vmatpush2.xpose.msra.mxu0 0.0
        %1992 = vmatprep.mubr.f32.mxu0 0.0
        %v1993 = vand.u32 %v1549, 4294901760
        %1994 = vmatmul.mubr.f32.gmra.mxu0 %v1993
        %v1995 = vpop.f32.mrf.mxu0
        %v1996 = vadd.f32 %v1924, %v1995
        %v1997 = vpop.f32.mrf.mxu0
        %1998 = vdwg.mxu0
        %v2000 = vsel %vm414, %v1536, 0
        %2002 = vmatprep.subr.mxu0 0.0
        %2003 = vmatpush1.xpose.msra.mxu0 0.0
        %2004 = vmatprep.subr.mxu0 0.0
        %2005 = vmatpush1.xpose.msra.mxu0 0.0
        %2006 = vmatprep.subr.mxu0 0.0
        %2007 = vmatpush1.xpose.msra.mxu0 0.0
        %2008 = vmatprep.subr.mxu0 0.0
        %2009 = vmatpush1.xpose.msra.mxu0 0.0
        %2010 = vmatprep.subr.mxu0 0.0
        %2011 = vmatpush1.xpose.msra.mxu0 0.0
        %2012 = vmatprep.subr.mxu0 0.0
        %2013 = vmatpush1.xpose.msra.mxu0 0.0
        %2014 = vmatprep.subr.mxu0 0.0
        %2015 = vmatpush1.xpose.msra.mxu0 0.0
        %2016 = vmatprep.subr.mxu0 0.0
        %2017 = vmatpush1.xpose.msra.mxu0 0.0
        %2018 = vmatprep.subr.mxu0 0.0
        %2019 = vmatpush1.xpose.msra.mxu0 0.0
        %2020 = vmatprep.subr.mxu0 0.0
        %2021 = vmatpush1.xpose.msra.mxu0 0.0
        %2022 = vmatprep.subr.mxu0 0.0
        %2023 = vmatpush1.xpose.msra.mxu0 0.0
        %2024 = vmatprep.subr.mxu0 0.0
        %2025 = vmatpush1.xpose.msra.mxu0 0.0
        %2026 = vmatprep.subr.mxu0 0.0
        %2027 = vmatpush1.xpose.msra.mxu0 0.0
        %2028 = vmatprep.subr.mxu0 0.0
        %2029 = vmatpush1.xpose.msra.mxu0 0.0
        %2030 = vmatprep.subr.mxu0 0.0
        %2031 = vmatpush1.xpose.msra.mxu0 0.0
        %2032 = vmatprep.subr.mxu0 0.0
        %v2033 = vand.u32 %v1551, 4294901760
        %2034 = vmatpush1.xpose.msra.mxu0 %v2033
        %2035 = vmatprep.subr.mxu0 0.0
        %2036 = vmatpush2.xpose.msra.mxu0 0.0
        %2037 = vmatprep.subr.mxu0 0.0
        %2038 = vmatpush2.xpose.msra.mxu0 0.0
        %2039 = vmatprep.subr.mxu0 0.0
        %2040 = vmatpush2.xpose.msra.mxu0 0.0
        %2041 = vmatprep.subr.mxu0 0.0
        %2042 = vmatpush2.xpose.msra.mxu0 0.0
        %2043 = vmatprep.subr.mxu0 0.0
        %2044 = vmatpush2.xpose.msra.mxu0 0.0
        %2045 = vmatprep.subr.mxu0 0.0
        %2046 = vmatpush2.xpose.msra.mxu0 0.0
        %2047 = vmatprep.subr.mxu0 0.0
        %2048 = vmatpush2.xpose.msra.mxu0 0.0
        %2049 = vmatprep.subr.mxu0 0.0
        %2050 = vmatpush2.xpose.msra.mxu0 0.0
        %2051 = vmatprep.subr.mxu0 0.0
        %2052 = vmatpush2.xpose.msra.mxu0 0.0
        %2053 = vmatprep.subr.mxu0 0.0
        %2054 = vmatpush2.xpose.msra.mxu0 0.0
        %2055 = vmatprep.subr.mxu0 0.0
        %2056 = vmatpush2.xpose.msra.mxu0 0.0
        %2057 = vmatprep.subr.mxu0 0.0
        %2058 = vmatpush2.xpose.msra.mxu0 0.0
        %2059 = vmatprep.subr.mxu0 0.0
        %2060 = vmatpush2.xpose.msra.mxu0 0.0
        %2061 = vmatprep.subr.mxu0 0.0
        %2062 = vmatpush2.xpose.msra.mxu0 0.0
        %2063 = vmatprep.subr.mxu0 0.0
        %2064 = vmatpush2.xpose.msra.mxu0 0.0
        %2065 = vmatprep.subr.mxu0 0.0
        %2066 = vmatpush2.xpose.msra.mxu0 0.0
        %2067 = vmatprep.mubr.f32.mxu0 0.0
        %v2068 = vand.u32 %v2000, 4294901760
        %v2069 = vsub.f32 %v2000, %v2068
        %v2070 = vand.u32 %v2069, 4294901760
        %v2071 = vsub.f32 %v2069, %v2070
        %v2072 = vand.u32 %v2071, 4294901760
        %2073 = vmatmul.mubr.f32.gmra.mxu0 %v2072
        %v2074 = vpop.f32.mrf.mxu0
        %v2075 = vadd.f32 0.0, %v2074
        %v2076 = vpop.f32.mrf.mxu0
        %2077 = vdwg.mxu0
        %2078 = vmatprep.subr.mxu0 0.0
        %2079 = vmatpush1.xpose.msra.mxu0 0.0
        %2080 = vmatprep.subr.mxu0 0.0
        %2081 = vmatpush1.xpose.msra.mxu0 0.0
        %2082 = vmatprep.subr.mxu0 0.0
        %2083 = vmatpush1.xpose.msra.mxu0 0.0
        %2084 = vmatprep.subr.mxu0 0.0
        %2085 = vmatpush1.xpose.msra.mxu0 0.0
        %2086 = vmatprep.subr.mxu0 0.0
        %2087 = vmatpush1.xpose.msra.mxu0 0.0
        %2088 = vmatprep.subr.mxu0 0.0
        %2089 = vmatpush1.xpose.msra.mxu0 0.0
        %2090 = vmatprep.subr.mxu0 0.0
        %2091 = vmatpush1.xpose.msra.mxu0 0.0
        %2092 = vmatprep.subr.mxu0 0.0
        %2093 = vmatpush1.xpose.msra.mxu0 0.0
        %2094 = vmatprep.subr.mxu0 0.0
        %2095 = vmatpush1.xpose.msra.mxu0 0.0
        %2096 = vmatprep.subr.mxu0 0.0
        %2097 = vmatpush1.xpose.msra.mxu0 0.0
        %2098 = vmatprep.subr.mxu0 0.0
        %2099 = vmatpush1.xpose.msra.mxu0 0.0
        %2100 = vmatprep.subr.mxu0 0.0
        %2101 = vmatpush1.xpose.msra.mxu0 0.0
        %2102 = vmatprep.subr.mxu0 0.0
        %2103 = vmatpush1.xpose.msra.mxu0 0.0
        %2104 = vmatprep.subr.mxu0 0.0
        %2105 = vmatpush1.xpose.msra.mxu0 0.0
        %2106 = vmatprep.subr.mxu0 0.0
        %2107 = vmatpush1.xpose.msra.mxu0 0.0
        %2108 = vmatprep.subr.mxu0 0.0
        %v2109 = vand.u32 %v1551, 4294901760
        %v2110 = vsub.f32 %v1551, %v2109
        %v2111 = vand.u32 %v2110, 4294901760
        %v2112 = vsub.f32 %v2110, %v2111
        %v2113 = vand.u32 %v2112, 4294901760
        %2114 = vmatpush1.xpose.msra.mxu0 %v2113
        %2115 = vmatprep.subr.mxu0 0.0
        %2116 = vmatpush2.xpose.msra.mxu0 0.0
        %2117 = vmatprep.subr.mxu0 0.0
        %2118 = vmatpush2.xpose.msra.mxu0 0.0
        %2119 = vmatprep.subr.mxu0 0.0
        %2120 = vmatpush2.xpose.msra.mxu0 0.0
        %2121 = vmatprep.subr.mxu0 0.0
        %2122 = vmatpush2.xpose.msra.mxu0 0.0
        %2123 = vmatprep.subr.mxu0 0.0
        %2124 = vmatpush2.xpose.msra.mxu0 0.0
        %2125 = vmatprep.subr.mxu0 0.0
        %2126 = vmatpush2.xpose.msra.mxu0 0.0
        %2127 = vmatprep.subr.mxu0 0.0
        %2128 = vmatpush2.xpose.msra.mxu0 0.0
        %2129 = vmatprep.subr.mxu0 0.0
        %2130 = vmatpush2.xpose.msra.mxu0 0.0
        %2131 = vmatprep.subr.mxu0 0.0
        %2132 = vmatpush2.xpose.msra.mxu0 0.0
        %2133 = vmatprep.subr.mxu0 0.0
        %2134 = vmatpush2.xpose.msra.mxu0 0.0
        %2135 = vmatprep.subr.mxu0 0.0
        %2136 = vmatpush2.xpose.msra.mxu0 0.0
        %2137 = vmatprep.subr.mxu0 0.0
        %2138 = vmatpush2.xpose.msra.mxu0 0.0
        %2139 = vmatprep.subr.mxu0 0.0
        %2140 = vmatpush2.xpose.msra.mxu0 0.0
        %2141 = vmatprep.subr.mxu0 0.0
        %2142 = vmatpush2.xpose.msra.mxu0 0.0
        %2143 = vmatprep.subr.mxu0 0.0
        %2144 = vmatpush2.xpose.msra.mxu0 0.0
        %2145 = vmatprep.subr.mxu0 0.0
        %2146 = vmatpush2.xpose.msra.mxu0 0.0
        %2147 = vmatprep.mubr.f32.mxu0 0.0
        %v2148 = vand.u32 %v2000, 4294901760
        %2149 = vmatmul.mubr.f32.gmra.mxu0 %v2148
        %v2150 = vpop.f32.mrf.mxu0
        %v2151 = vadd.f32 %v2075, %v2150
        %v2152 = vpop.f32.mrf.mxu0
        %2153 = vdwg.mxu0
        %2154 = vmatprep.subr.mxu0 0.0
        %2155 = vmatpush1.xpose.msra.mxu0 0.0
        %2156 = vmatprep.subr.mxu0 0.0
        %2157 = vmatpush1.xpose.msra.mxu0 0.0
        %2158 = vmatprep.subr.mxu0 0.0
        %2159 = vmatpush1.xpose.msra.mxu0 0.0
        %2160 = vmatprep.subr.mxu0 0.0
        %2161 = vmatpush1.xpose.msra.mxu0 0.0
        %2162 = vmatprep.subr.mxu0 0.0
        %2163 = vmatpush1.xpose.msra.mxu0 0.0
        %2164 = vmatprep.subr.mxu0 0.0
        %2165 = vmatpush1.xpose.msra.mxu0 0.0
        %2166 = vmatprep.subr.mxu0 0.0
        %2167 = vmatpush1.xpose.msra.mxu0 0.0
        %2168 = vmatprep.subr.mxu0 0.0
        %2169 = vmatpush1.xpose.msra.mxu0 0.0
        %2170 = vmatprep.subr.mxu0 0.0
        %2171 = vmatpush1.xpose.msra.mxu0 0.0
        %2172 = vmatprep.subr.mxu0 0.0
        %2173 = vmatpush1.xpose.msra.mxu0 0.0
        %2174 = vmatprep.subr.mxu0 0.0
        %2175 = vmatpush1.xpose.msra.mxu0 0.0
        %2176 = vmatprep.subr.mxu0 0.0
        %2177 = vmatpush1.xpose.msra.mxu0 0.0
        %2178 = vmatprep.subr.mxu0 0.0
        %2179 = vmatpush1.xpose.msra.mxu0 0.0
        %2180 = vmatprep.subr.mxu0 0.0
        %2181 = vmatpush1.xpose.msra.mxu0 0.0
        %2182 = vmatprep.subr.mxu0 0.0
        %2183 = vmatpush1.xpose.msra.mxu0 0.0
        %2184 = vmatprep.subr.mxu0 0.0
        %v2185 = vand.u32 %v1551, 4294901760
        %v2186 = vsub.f32 %v1551, %v2185
        %2187 = vmatpush1.xpose.msra.mxu0 %v2186
        %2188 = vmatprep.subr.mxu0 0.0
        %2189 = vmatpush2.xpose.msra.mxu0 0.0
        %2190 = vmatprep.subr.mxu0 0.0
        %2191 = vmatpush2.xpose.msra.mxu0 0.0
        %2192 = vmatprep.subr.mxu0 0.0
        %2193 = vmatpush2.xpose.msra.mxu0 0.0
        %2194 = vmatprep.subr.mxu0 0.0
        %2195 = vmatpush2.xpose.msra.mxu0 0.0
        %2196 = vmatprep.subr.mxu0 0.0
        %2197 = vmatpush2.xpose.msra.mxu0 0.0
        %2198 = vmatprep.subr.mxu0 0.0
        %2199 = vmatpush2.xpose.msra.mxu0 0.0
        %2200 = vmatprep.subr.mxu0 0.0
        %2201 = vmatpush2.xpose.msra.mxu0 0.0
        %2202 = vmatprep.subr.mxu0 0.0
        %2203 = vmatpush2.xpose.msra.mxu0 0.0
        %2204 = vmatprep.subr.mxu0 0.0
        %2205 = vmatpush2.xpose.msra.mxu0 0.0
        %2206 = vmatprep.subr.mxu0 0.0
        %2207 = vmatpush2.xpose.msra.mxu0 0.0
        %2208 = vmatprep.subr.mxu0 0.0
        %2209 = vmatpush2.xpose.msra.mxu0 0.0
        %2210 = vmatprep.subr.mxu0 0.0
        %2211 = vmatpush2.xpose.msra.mxu0 0.0
        %2212 = vmatprep.subr.mxu0 0.0
        %2213 = vmatpush2.xpose.msra.mxu0 0.0
        %2214 = vmatprep.subr.mxu0 0.0
        %2215 = vmatpush2.xpose.msra.mxu0 0.0
        %2216 = vmatprep.subr.mxu0 0.0
        %2217 = vmatpush2.xpose.msra.mxu0 0.0
        %2218 = vmatprep.subr.mxu0 0.0
        %2219 = vmatpush2.xpose.msra.mxu0 0.0
        %2220 = vmatprep.mubr.f32.mxu0 0.0
        %v2221 = vand.u32 %v2000, 4294901760
        %v2222 = vsub.f32 %v2000, %v2221
        %2223 = vmatmul.mubr.f32.gmra.mxu0 %v2222
        %v2224 = vpop.f32.mrf.mxu0
        %v2225 = vadd.f32 %v2151, %v2224
        %v2226 = vpop.f32.mrf.mxu0
        %2227 = vdwg.mxu0
        %2228 = vmatprep.subr.mxu0 0.0
        %2229 = vmatpush1.xpose.msra.mxu0 0.0
        %2230 = vmatprep.subr.mxu0 0.0
        %2231 = vmatpush1.xpose.msra.mxu0 0.0
        %2232 = vmatprep.subr.mxu0 0.0
        %2233 = vmatpush1.xpose.msra.mxu0 0.0
        %2234 = vmatprep.subr.mxu0 0.0
        %2235 = vmatpush1.xpose.msra.mxu0 0.0
        %2236 = vmatprep.subr.mxu0 0.0
        %2237 = vmatpush1.xpose.msra.mxu0 0.0
        %2238 = vmatprep.subr.mxu0 0.0
        %2239 = vmatpush1.xpose.msra.mxu0 0.0
        %2240 = vmatprep.subr.mxu0 0.0
        %2241 = vmatpush1.xpose.msra.mxu0 0.0
        %2242 = vmatprep.subr.mxu0 0.0
        %2243 = vmatpush1.xpose.msra.mxu0 0.0
        %2244 = vmatprep.subr.mxu0 0.0
        %2245 = vmatpush1.xpose.msra.mxu0 0.0
        %2246 = vmatprep.subr.mxu0 0.0
        %2247 = vmatpush1.xpose.msra.mxu0 0.0
        %2248 = vmatprep.subr.mxu0 0.0
        %2249 = vmatpush1.xpose.msra.mxu0 0.0
        %2250 = vmatprep.subr.mxu0 0.0
        %2251 = vmatpush1.xpose.msra.mxu0 0.0
        %2252 = vmatprep.subr.mxu0 0.0
        %2253 = vmatpush1.xpose.msra.mxu0 0.0
        %2254 = vmatprep.subr.mxu0 0.0
        %2255 = vmatpush1.xpose.msra.mxu0 0.0
        %2256 = vmatprep.subr.mxu0 0.0
        %2257 = vmatpush1.xpose.msra.mxu0 0.0
        %2258 = vmatprep.subr.mxu0 0.0
        %v2259 = vand.u32 %v1551, 4294901760
        %2260 = vmatpush1.xpose.msra.mxu0 %v2259
        %2261 = vmatprep.subr.mxu0 0.0
        %2262 = vmatpush2.xpose.msra.mxu0 0.0
        %2263 = vmatprep.subr.mxu0 0.0
        %2264 = vmatpush2.xpose.msra.mxu0 0.0
        %2265 = vmatprep.subr.mxu0 0.0
        %2266 = vmatpush2.xpose.msra.mxu0 0.0
        %2267 = vmatprep.subr.mxu0 0.0
        %2268 = vmatpush2.xpose.msra.mxu0 0.0
        %2269 = vmatprep.subr.mxu0 0.0
        %2270 = vmatpush2.xpose.msra.mxu0 0.0
        %2271 = vmatprep.subr.mxu0 0.0
        %2272 = vmatpush2.xpose.msra.mxu0 0.0
        %2273 = vmatprep.subr.mxu0 0.0
        %2274 = vmatpush2.xpose.msra.mxu0 0.0
        %2275 = vmatprep.subr.mxu0 0.0
        %2276 = vmatpush2.xpose.msra.mxu0 0.0
        %2277 = vmatprep.subr.mxu0 0.0
        %2278 = vmatpush2.xpose.msra.mxu0 0.0
        %2279 = vmatprep.subr.mxu0 0.0
        %2280 = vmatpush2.xpose.msra.mxu0 0.0
        %2281 = vmatprep.subr.mxu0 0.0
        %2282 = vmatpush2.xpose.msra.mxu0 0.0
        %2283 = vmatprep.subr.mxu0 0.0
        %2284 = vmatpush2.xpose.msra.mxu0 0.0
        %2285 = vmatprep.subr.mxu0 0.0
        %2286 = vmatpush2.xpose.msra.mxu0 0.0
        %2287 = vmatprep.subr.mxu0 0.0
        %2288 = vmatpush2.xpose.msra.mxu0 0.0
        %2289 = vmatprep.subr.mxu0 0.0
        %2290 = vmatpush2.xpose.msra.mxu0 0.0
        %2291 = vmatprep.subr.mxu0 0.0
        %2292 = vmatpush2.xpose.msra.mxu0 0.0
        %2293 = vmatprep.mubr.f32.mxu0 0.0
        %v2294 = vand.u32 %v2000, 4294901760
        %v2295 = vsub.f32 %v2000, %v2294
        %v2296 = vand.u32 %v2295, 4294901760
        %2297 = vmatmul.mubr.f32.gmra.mxu0 %v2296
        %v2298 = vpop.f32.mrf.mxu0
        %v2299 = vadd.f32 %v2225, %v2298
        %v2300 = vpop.f32.mrf.mxu0
        %2301 = vdwg.mxu0
        %2302 = vmatprep.subr.mxu0 0.0
        %2303 = vmatpush1.xpose.msra.mxu0 0.0
        %2304 = vmatprep.subr.mxu0 0.0
        %2305 = vmatpush1.xpose.msra.mxu0 0.0
        %2306 = vmatprep.subr.mxu0 0.0
        %2307 = vmatpush1.xpose.msra.mxu0 0.0
        %2308 = vmatprep.subr.mxu0 0.0
        %2309 = vmatpush1.xpose.msra.mxu0 0.0
        %2310 = vmatprep.subr.mxu0 0.0
        %2311 = vmatpush1.xpose.msra.mxu0 0.0
        %2312 = vmatprep.subr.mxu0 0.0
        %2313 = vmatpush1.xpose.msra.mxu0 0.0
        %2314 = vmatprep.subr.mxu0 0.0
        %2315 = vmatpush1.xpose.msra.mxu0 0.0
        %2316 = vmatprep.subr.mxu0 0.0
        %2317 = vmatpush1.xpose.msra.mxu0 0.0
        %2318 = vmatprep.subr.mxu0 0.0
        %2319 = vmatpush1.xpose.msra.mxu0 0.0
        %2320 = vmatprep.subr.mxu0 0.0
        %2321 = vmatpush1.xpose.msra.mxu0 0.0
        %2322 = vmatprep.subr.mxu0 0.0
        %2323 = vmatpush1.xpose.msra.mxu0 0.0
        %2324 = vmatprep.subr.mxu0 0.0
        %2325 = vmatpush1.xpose.msra.mxu0 0.0
        %2326 = vmatprep.subr.mxu0 0.0
        %2327 = vmatpush1.xpose.msra.mxu0 0.0
        %2328 = vmatprep.subr.mxu0 0.0
        %2329 = vmatpush1.xpose.msra.mxu0 0.0
        %2330 = vmatprep.subr.mxu0 0.0
        %2331 = vmatpush1.xpose.msra.mxu0 0.0
        %2332 = vmatprep.subr.mxu0 0.0
        %v2333 = vand.u32 %v1551, 4294901760
        %v2334 = vsub.f32 %v1551, %v2333
        %v2335 = vand.u32 %v2334, 4294901760
        %2336 = vmatpush1.xpose.msra.mxu0 %v2335
        %2337 = vmatprep.subr.mxu0 0.0
        %2338 = vmatpush2.xpose.msra.mxu0 0.0
        %2339 = vmatprep.subr.mxu0 0.0
        %2340 = vmatpush2.xpose.msra.mxu0 0.0
        %2341 = vmatprep.subr.mxu0 0.0
        %2342 = vmatpush2.xpose.msra.mxu0 0.0
        %2343 = vmatprep.subr.mxu0 0.0
        %2344 = vmatpush2.xpose.msra.mxu0 0.0
        %2345 = vmatprep.subr.mxu0 0.0
        %2346 = vmatpush2.xpose.msra.mxu0 0.0
        %2347 = vmatprep.subr.mxu0 0.0
        %2348 = vmatpush2.xpose.msra.mxu0 0.0
        %2349 = vmatprep.subr.mxu0 0.0
        %2350 = vmatpush2.xpose.msra.mxu0 0.0
        %2351 = vmatprep.subr.mxu0 0.0
        %2352 = vmatpush2.xpose.msra.mxu0 0.0
        %2353 = vmatprep.subr.mxu0 0.0
        %2354 = vmatpush2.xpose.msra.mxu0 0.0
        %2355 = vmatprep.subr.mxu0 0.0
        %2356 = vmatpush2.xpose.msra.mxu0 0.0
        %2357 = vmatprep.subr.mxu0 0.0
        %2358 = vmatpush2.xpose.msra.mxu0 0.0
        %2359 = vmatprep.subr.mxu0 0.0
        %2360 = vmatpush2.xpose.msra.mxu0 0.0
        %2361 = vmatprep.subr.mxu0 0.0
        %2362 = vmatpush2.xpose.msra.mxu0 0.0
        %2363 = vmatprep.subr.mxu0 0.0
        %2364 = vmatpush2.xpose.msra.mxu0 0.0
        %2365 = vmatprep.subr.mxu0 0.0
        %2366 = vmatpush2.xpose.msra.mxu0 0.0
        %2367 = vmatprep.subr.mxu0 0.0
        %2368 = vmatpush2.xpose.msra.mxu0 0.0
        %2369 = vmatprep.mubr.f32.mxu0 0.0
        %v2370 = vand.u32 %v2000, 4294901760
        %2371 = vmatmul.mubr.f32.gmra.mxu0 %v2370
        %v2372 = vpop.f32.mrf.mxu0
        %v2373 = vadd.f32 %v2299, %v2372
        %v2374 = vpop.f32.mrf.mxu0
        %2375 = vdwg.mxu0
        %2376 = vmatprep.subr.mxu0 0.0
        %2377 = vmatpush1.xpose.msra.mxu0 0.0
        %2378 = vmatprep.subr.mxu0 0.0
        %2379 = vmatpush1.xpose.msra.mxu0 0.0
        %2380 = vmatprep.subr.mxu0 0.0
        %2381 = vmatpush1.xpose.msra.mxu0 0.0
        %2382 = vmatprep.subr.mxu0 0.0
        %2383 = vmatpush1.xpose.msra.mxu0 0.0
        %2384 = vmatprep.subr.mxu0 0.0
        %2385 = vmatpush1.xpose.msra.mxu0 0.0
        %2386 = vmatprep.subr.mxu0 0.0
        %2387 = vmatpush1.xpose.msra.mxu0 0.0
        %2388 = vmatprep.subr.mxu0 0.0
        %2389 = vmatpush1.xpose.msra.mxu0 0.0
        %2390 = vmatprep.subr.mxu0 0.0
        %2391 = vmatpush1.xpose.msra.mxu0 0.0
        %2392 = vmatprep.subr.mxu0 0.0
        %2393 = vmatpush1.xpose.msra.mxu0 0.0
        %2394 = vmatprep.subr.mxu0 0.0
        %2395 = vmatpush1.xpose.msra.mxu0 0.0
        %2396 = vmatprep.subr.mxu0 0.0
        %2397 = vmatpush1.xpose.msra.mxu0 0.0
        %2398 = vmatprep.subr.mxu0 0.0
        %2399 = vmatpush1.xpose.msra.mxu0 0.0
        %2400 = vmatprep.subr.mxu0 0.0
        %2401 = vmatpush1.xpose.msra.mxu0 0.0
        %2402 = vmatprep.subr.mxu0 0.0
        %2403 = vmatpush1.xpose.msra.mxu0 0.0
        %2404 = vmatprep.subr.mxu0 0.0
        %2405 = vmatpush1.xpose.msra.mxu0 0.0
        %2406 = vmatprep.subr.mxu0 0.0
        %v2407 = vand.u32 %v1551, 4294901760
        %2408 = vmatpush1.xpose.msra.mxu0 %v2407
        %2409 = vmatprep.subr.mxu0 0.0
        %2410 = vmatpush2.xpose.msra.mxu0 0.0
        %2411 = vmatprep.subr.mxu0 0.0
        %2412 = vmatpush2.xpose.msra.mxu0 0.0
        %2413 = vmatprep.subr.mxu0 0.0
        %2414 = vmatpush2.xpose.msra.mxu0 0.0
        %2415 = vmatprep.subr.mxu0 0.0
        %2416 = vmatpush2.xpose.msra.mxu0 0.0
        %2417 = vmatprep.subr.mxu0 0.0
        %2418 = vmatpush2.xpose.msra.mxu0 0.0
        %2419 = vmatprep.subr.mxu0 0.0
        %2420 = vmatpush2.xpose.msra.mxu0 0.0
        %2421 = vmatprep.subr.mxu0 0.0
        %2422 = vmatpush2.xpose.msra.mxu0 0.0
        %2423 = vmatprep.subr.mxu0 0.0
        %2424 = vmatpush2.xpose.msra.mxu0 0.0
        %2425 = vmatprep.subr.mxu0 0.0
        %2426 = vmatpush2.xpose.msra.mxu0 0.0
        %2427 = vmatprep.subr.mxu0 0.0
        %2428 = vmatpush2.xpose.msra.mxu0 0.0
        %2429 = vmatprep.subr.mxu0 0.0
        %2430 = vmatpush2.xpose.msra.mxu0 0.0
        %2431 = vmatprep.subr.mxu0 0.0
        %2432 = vmatpush2.xpose.msra.mxu0 0.0
        %2433 = vmatprep.subr.mxu0 0.0
        %2434 = vmatpush2.xpose.msra.mxu0 0.0
        %2435 = vmatprep.subr.mxu0 0.0
        %2436 = vmatpush2.xpose.msra.mxu0 0.0
        %2437 = vmatprep.subr.mxu0 0.0
        %2438 = vmatpush2.xpose.msra.mxu0 0.0
        %2439 = vmatprep.subr.mxu0 0.0
        %2440 = vmatpush2.xpose.msra.mxu0 0.0
        %2441 = vmatprep.mubr.f32.mxu0 0.0
        %v2442 = vand.u32 %v2000, 4294901760
        %2443 = vmatmul.mubr.f32.gmra.mxu0 %v2442
        %v2444 = vpop.f32.mrf.mxu0
        %v2445 = vadd.f32 %v2373, %v2444
        %v2446 = vpop.f32.mrf.mxu0
        %2447 = vdwg.mxu0
        %v2448 = vand.u32 2147483647, %v1996
        %v2449 = vand.u32 2147483647, %v2445
        %v2450 = vmin.f32 %v2448, 1.0
        %v2451 = vmin.f32 %v2449, 1.0
        %v2452 = vmul.f32 %v2450, -0.0004018634
        %v2453 = vmul.f32 %v2451, -0.0004018634
        %v2454 = vadd.f32 %v2452, 0.0021231556
        %v2455 = vadd.f32 %v2453, 0.0021231556
        %v2456 = vmul.f32 %v2454, %v2450
        %v2457 = vmul.f32 %v2455, %v2451
        %v2458 = vadd.f32 %v2456, -0.005439319
        %v2459 = vadd.f32 %v2457, -0.005439319
        %v2460 = vmul.f32 %v2458, %v2450
        %v2461 = vmul.f32 %v2459, %v2451
        %v2462 = vadd.f32 %v2460, 0.0098331915
        %v2463 = vadd.f32 %v2461, 0.0098331915
        %v2464 = vmul.f32 %v2462, %v2450
        %v2465 = vmul.f32 %v2463, %v2451
        %v2466 = vadd.f32 %v2464, -0.015970977
        %v2467 = vadd.f32 %v2465, -0.015970977
        %v2468 = vmul.f32 %v2466, %v2450
        %v2469 = vmul.f32 %v2467, %v2451
        %v2470 = vadd.f32 %v2468, 0.028322892
        %v2471 = vadd.f32 %v2469, 0.028322892
        %v2472 = vmul.f32 %v2470, %v2450
        %v2473 = vmul.f32 %v2471, %v2451
        %v2474 = vadd.f32 %v2472, -0.06830892
        %v2475 = vadd.f32 %v2473, -0.06830892
        %v2476 = vmul.f32 %v2474, %v2450
        %v2477 = vmul.f32 %v2475, %v2451
        %v2478 = vadd.f32 %v2476, 0.5
        %v2479 = vadd.f32 %v2477, 0.5
        %v2480 = vsub.f32 1.0, %v2450
        %v2481 = vsub.f32 1.0, %v2451
        %v2482 = vrsqrt.pop %v2480
        %v2483 = vmul.f32 %v2480, %v2482
        %vm2484 = vcmp.eq.f32.partialorder %v2480, inf
        %v2485 = vsel %vm2484, %v2480, %v2483
        %vm2486 = vcmp.eq.f32.partialorder %v2480, 0.0
        %v2487 = vand.u32 %v2480, 2147483648
        %v2488 = vsel %vm2486, %v2487, %v2485
        %v2489 = vrsqrt.pop %v2481
        %v2490 = vmul.f32 %v2481, %v2489
        %vm2491 = vcmp.eq.f32.partialorder %v2481, inf
        %v2492 = vsel %vm2491, %v2481, %v2490
        %vm2493 = vcmp.eq.f32.partialorder %v2481, 0.0
        %v2494 = vand.u32 %v2481, 2147483648
        %v2495 = vsel %vm2493, %v2494, %v2492
        %v2496 = vmul.f32 %v2478, %v2488
        %v2497 = vmul.f32 %v2479, %v2495
        %vm2498 = vcmp.lt.f32.partialorder %v1996, 0.0
        %vm2499 = vcmp.lt.f32.partialorder %v2445, 0.0
        %v2500 = vsub.f32 1.0, %v2496
        %v2501 = vsub.f32 1.0, %v2497
        %v2502 = vsel %vm2498, %v2496, %v2500
        %v2503 = vsel %vm2499, %v2497, %v2501
        %v2504 = vmul.f32 %v2502, %v2502
        %v2505 = vmul.f32 %v2503, %v2503
        %v2506 = vmul.f32 %v2504, %v2504
        %v2507 = vmul.f32 %v2505, %v2505
        %v2508 = vmul.f32 %v2506, %v2506
        %v2509 = vmul.f32 %v2507, %v2507
        %2511 = vrot.lane.b32.xlu0 %v1543, 64
        %v2512 = vpop.permute.xlu0 %2511
        %vm2514 = vcmask 64512
        %v2516 = vsel %vm2514, %v2508, 0
        %2518 = vmatprep.subr.mxu0 0.0
        %2519 = vmatpush1.msra.mxu0 0.0
        %2520 = vmatprep.subr.mxu0 0.0
        %2521 = vmatpush1.msra.mxu0 0.0
        %2522 = vmatprep.subr.mxu0 0.0
        %2523 = vmatpush1.msra.mxu0 0.0
        %2524 = vmatprep.subr.mxu0 0.0
        %2525 = vmatpush1.msra.mxu0 0.0
        %2526 = vmatprep.subr.mxu0 0.0
        %2527 = vmatpush1.msra.mxu0 0.0
        %2528 = vmatprep.subr.mxu0 0.0
        %2529 = vmatpush1.msra.mxu0 0.0
        %2530 = vmatprep.subr.mxu0 0.0
        %2531 = vmatpush1.msra.mxu0 0.0
        %2532 = vmatprep.subr.mxu0 0.0
        %2533 = vmatpush1.msra.mxu0 0.0
        %2534 = vmatprep.subr.mxu0 0.0
        %2535 = vmatpush1.msra.mxu0 0.0
        %2536 = vmatprep.subr.mxu0 0.0
        %2537 = vmatpush1.msra.mxu0 0.0
        %2538 = vmatprep.subr.mxu0 0.0
        %2539 = vmatpush1.msra.mxu0 0.0
        %2540 = vmatprep.subr.mxu0 0.0
        %2541 = vmatpush1.msra.mxu0 0.0
        %2542 = vmatprep.subr.mxu0 0.0
        %2543 = vmatpush1.msra.mxu0 0.0
        %2544 = vmatprep.subr.mxu0 0.0
        %2545 = vmatpush1.msra.mxu0 0.0
        %2546 = vmatprep.subr.mxu0 0.0
        %2547 = vmatpush1.msra.mxu0 0.0
        %2548 = vmatprep.subr.mxu0 0.0
        %2549 = vmatpush1.msra.mxu0 %v2512
        %2550 = vmatprep.subr.mxu0 0.0
        %2551 = vmatpush2.msra.mxu0 0.0
        %2552 = vmatprep.subr.mxu0 0.0
        %2553 = vmatpush2.msra.mxu0 0.0
        %2554 = vmatprep.subr.mxu0 0.0
        %2555 = vmatpush2.msra.mxu0 0.0
        %2556 = vmatprep.subr.mxu0 0.0
        %2557 = vmatpush2.msra.mxu0 0.0
        %2558 = vmatprep.subr.mxu0 0.0
        %2559 = vmatpush2.msra.mxu0 0.0
        %2560 = vmatprep.subr.mxu0 0.0
        %2561 = vmatpush2.msra.mxu0 0.0
        %2562 = vmatprep.subr.mxu0 0.0
        %2563 = vmatpush2.msra.mxu0 0.0
        %2564 = vmatprep.subr.mxu0 0.0
        %2565 = vmatpush2.msra.mxu0 0.0
        %2566 = vmatprep.subr.mxu0 0.0
        %2567 = vmatpush2.msra.mxu0 0.0
        %2568 = vmatprep.subr.mxu0 0.0
        %2569 = vmatpush2.msra.mxu0 0.0
        %2570 = vmatprep.subr.mxu0 0.0
        %2571 = vmatpush2.msra.mxu0 0.0
        %2572 = vmatprep.subr.mxu0 0.0
        %2573 = vmatpush2.msra.mxu0 0.0
        %2574 = vmatprep.subr.mxu0 0.0
        %2575 = vmatpush2.msra.mxu0 0.0
        %2576 = vmatprep.subr.mxu0 0.0
        %2577 = vmatpush2.msra.mxu0 0.0
        %2578 = vmatprep.subr.mxu0 0.0
        %2579 = vmatpush2.msra.mxu0 0.0
        %2580 = vmatprep.subr.mxu0 0.0
        %2581 = vmatpush2.msra.mxu0 0.0
        %2582 = vmatprep.mubr.f32.mxu0 0.0
        %2583 = vmatmul.mubr.f32.gmra.mxu0 %v2516
        %v2584 = vpop.f32.mrf.mxu0
        %v2585 = vadd.f32 0.0, %v2584
        %v2586 = vpop.f32.mrf.mxu0
        %2587 = vdwg.mxu0
        %2589 = vrot.lane.b32.xlu0 %v1544, 64
        %v2590 = vpop.permute.xlu0 %2589
        %v2593 = vsel %vm2514, %v2509, 0
        %2595 = vmatprep.subr.mxu0 0.0
        %2596 = vmatpush1.msra.mxu0 0.0
        %2597 = vmatprep.subr.mxu0 0.0
        %2598 = vmatpush1.msra.mxu0 0.0
        %2599 = vmatprep.subr.mxu0 0.0
        %2600 = vmatpush1.msra.mxu0 0.0
        %2601 = vmatprep.subr.mxu0 0.0
        %2602 = vmatpush1.msra.mxu0 0.0
        %2603 = vmatprep.subr.mxu0 0.0
        %2604 = vmatpush1.msra.mxu0 0.0
        %2605 = vmatprep.subr.mxu0 0.0
        %2606 = vmatpush1.msra.mxu0 0.0
        %2607 = vmatprep.subr.mxu0 0.0
        %2608 = vmatpush1.msra.mxu0 0.0
        %2609 = vmatprep.subr.mxu0 0.0
        %2610 = vmatpush1.msra.mxu0 0.0
        %2611 = vmatprep.subr.mxu0 0.0
        %2612 = vmatpush1.msra.mxu0 0.0
        %2613 = vmatprep.subr.mxu0 0.0
        %2614 = vmatpush1.msra.mxu0 0.0
        %2615 = vmatprep.subr.mxu0 0.0
        %2616 = vmatpush1.msra.mxu0 0.0
        %2617 = vmatprep.subr.mxu0 0.0
        %2618 = vmatpush1.msra.mxu0 0.0
        %2619 = vmatprep.subr.mxu0 0.0
        %2620 = vmatpush1.msra.mxu0 0.0
        %2621 = vmatprep.subr.mxu0 0.0
        %2622 = vmatpush1.msra.mxu0 0.0
        %2623 = vmatprep.subr.mxu0 0.0
        %2624 = vmatpush1.msra.mxu0 0.0
        %2625 = vmatprep.subr.mxu0 0.0
        %2626 = vmatpush1.msra.mxu0 %v2590
        %2627 = vmatprep.subr.mxu0 0.0
        %2628 = vmatpush2.msra.mxu0 0.0
        %2629 = vmatprep.subr.mxu0 0.0
        %2630 = vmatpush2.msra.mxu0 0.0
        %2631 = vmatprep.subr.mxu0 0.0
        %2632 = vmatpush2.msra.mxu0 0.0
        %2633 = vmatprep.subr.mxu0 0.0
        %2634 = vmatpush2.msra.mxu0 0.0
        %2635 = vmatprep.subr.mxu0 0.0
        %2636 = vmatpush2.msra.mxu0 0.0
        %2637 = vmatprep.subr.mxu0 0.0
        %2638 = vmatpush2.msra.mxu0 0.0
        %2639 = vmatprep.subr.mxu0 0.0
        %2640 = vmatpush2.msra.mxu0 0.0
        %2641 = vmatprep.subr.mxu0 0.0
        %2642 = vmatpush2.msra.mxu0 0.0
        %2643 = vmatprep.subr.mxu0 0.0
        %2644 = vmatpush2.msra.mxu0 0.0
        %2645 = vmatprep.subr.mxu0 0.0
        %2646 = vmatpush2.msra.mxu0 0.0
        %2647 = vmatprep.subr.mxu0 0.0
        %2648 = vmatpush2.msra.mxu0 0.0
        %2649 = vmatprep.subr.mxu0 0.0
        %2650 = vmatpush2.msra.mxu0 0.0
        %2651 = vmatprep.subr.mxu0 0.0
        %2652 = vmatpush2.msra.mxu0 0.0
        %2653 = vmatprep.subr.mxu0 0.0
        %2654 = vmatpush2.msra.mxu0 0.0
        %2655 = vmatprep.subr.mxu0 0.0
        %2656 = vmatpush2.msra.mxu0 0.0
        %2657 = vmatprep.subr.mxu0 0.0
        %2658 = vmatpush2.msra.mxu0 0.0
        %2659 = vmatprep.mubr.f32.mxu0 0.0
        %2660 = vmatmul.mubr.f32.gmra.mxu0 %v2593
        %v2661 = vpop.f32.mrf.mxu0
        %v2662 = vadd.f32 0.0, %v2661
        %v2663 = vpop.f32.mrf.mxu0
        %2664 = vdwg.mxu0
        %v2665 = vsel %vm414, %v2585, 0.0
        %v2666 = vsel %vm414, %v2662, 0.0
        %v2667 = vadd.f32 %v2665, %v2666
        %v2668 = vmul.f32 %v2667, %v402
        %v2669 = vld [vmem:[#allocation8] sm:$0xff]
        %v2670 = vld [vmem:[#allocation8 + $0x8] sm:$0xff]
        %v2671 = vld [vmem:[#allocation8 + $0x10] sm:$0xff]
        %v2672 = vld [vmem:[#allocation8 + $0x18] sm:$0xff]
        %v2673 = vld [vmem:[%s5] sm:$0x1]
        %v2675 = vlaneseq
        %v2676 = vshrl.u32 %v2675, 7
        %v2677 = vsub.s32 0, %v2676
        %v2678 = vrot.slane %v2673, %v2677
        %v2681 = vsel %vm414, %v2668, 0
        %2683 = vmatprep.subr.mxu0 0.0
        %2684 = vmatpush1.msra.mxu0 0.0
        %2685 = vmatprep.subr.mxu0 0.0
        %2686 = vmatpush1.msra.mxu0 0.0
        %2687 = vmatprep.subr.mxu0 0.0
        %2688 = vmatpush1.msra.mxu0 0.0
        %2689 = vmatprep.subr.mxu0 0.0
        %2690 = vmatpush1.msra.mxu0 0.0
        %2691 = vmatprep.subr.mxu0 0.0
        %2692 = vmatpush1.msra.mxu0 0.0
        %2693 = vmatprep.subr.mxu0 0.0
        %2694 = vmatpush1.msra.mxu0 0.0
        %2695 = vmatprep.subr.mxu0 0.0
        %2696 = vmatpush1.msra.mxu0 0.0
        %2697 = vmatprep.subr.mxu0 0.0
        %2698 = vmatpush1.msra.mxu0 0.0
        %2699 = vmatprep.subr.mxu0 0.0
        %2700 = vmatpush1.msra.mxu0 0.0
        %2701 = vmatprep.subr.mxu0 0.0
        %2702 = vmatpush1.msra.mxu0 0.0
        %2703 = vmatprep.subr.mxu0 0.0
        %2704 = vmatpush1.msra.mxu0 0.0
        %2705 = vmatprep.subr.mxu0 0.0
        %2706 = vmatpush1.msra.mxu0 0.0
        %2707 = vmatprep.subr.mxu0 0.0
        %2708 = vmatpush1.msra.mxu0 %v2672
        %2709 = vmatprep.subr.mxu0 0.0
        %2710 = vmatpush1.msra.mxu0 %v2671
        %2711 = vmatprep.subr.mxu0 0.0
        %2712 = vmatpush1.msra.mxu0 %v2670
        %2713 = vmatprep.subr.mxu0 0.0
        %2714 = vmatpush1.msra.mxu0 %v2669
        %2715 = vmatprep.subr.mxu0 0.0
        %2716 = vmatpush2.msra.mxu0 0.0
        %2717 = vmatprep.subr.mxu0 0.0
        %2718 = vmatpush2.msra.mxu0 0.0
        %2719 = vmatprep.subr.mxu0 0.0
        %2720 = vmatpush2.msra.mxu0 0.0
        %2721 = vmatprep.subr.mxu0 0.0
        %2722 = vmatpush2.msra.mxu0 0.0
        %2723 = vmatprep.subr.mxu0 0.0
        %2724 = vmatpush2.msra.mxu0 0.0
        %2725 = vmatprep.subr.mxu0 0.0
        %2726 = vmatpush2.msra.mxu0 0.0
        %2727 = vmatprep.subr.mxu0 0.0
        %2728 = vmatpush2.msra.mxu0 0.0
        %2729 = vmatprep.subr.mxu0 0.0
        %2730 = vmatpush2.msra.mxu0 0.0
        %2731 = vmatprep.subr.mxu0 0.0
        %2732 = vmatpush2.msra.mxu0 0.0
        %2733 = vmatprep.subr.mxu0 0.0
        %2734 = vmatpush2.msra.mxu0 0.0
        %2735 = vmatprep.subr.mxu0 0.0
        %2736 = vmatpush2.msra.mxu0 0.0
        %2737 = vmatprep.subr.mxu0 0.0
        %2738 = vmatpush2.msra.mxu0 0.0
        %2739 = vmatprep.subr.mxu0 0.0
        %2740 = vmatpush2.msra.mxu0 0.0
        %2741 = vmatprep.subr.mxu0 0.0
        %2742 = vmatpush2.msra.mxu0 0.0
        %2743 = vmatprep.subr.mxu0 0.0
        %2744 = vmatpush2.msra.mxu0 0.0
        %2745 = vmatprep.subr.mxu0 0.0
        %2746 = vmatpush2.msra.mxu0 0.0
        %2747 = vmatprep.mubr.f32.mxu0 0.0
        %2748 = vmatmul.mubr.f32.gmra.mxu0 %v2681
        %v2749 = vpop.f32.mrf.mxu0
        %v2750 = vadd.f32 %v2678, %v2749
        %v2751 = vpop.f32.mrf.mxu0
        %2752 = vdwg.mxu0
        %2753 = vst.msk [vmem:[%s400] sm:$0xff] %vm414, %v2750
        %s2754 = sand.u32 %s215, 1
        %s2755 = scalar_lea.sflag [#allocation4], %s2754
        %s2756 = sand.u32 %s215, 1
        %s2757 = smul.addr %s2756, 8
        %s2758 = scalar_lea.vmem [#allocation11], %s2757
        // Predicated region
        $region73: #{tpu_custom_call.1} parent=51 // pred_check
          %p2759 = pneg %p225
        $region74: #{tpu_custom_call.1} parent=51 // pred_check_branch
          %2761 = sbr.rel (%p2759) target = $region76
        $region75: #{tpu_custom_call.1} parent=51 // pred_region
          %s2763 = ssub.s32 128, 128
          %2764 = vsyncadd %s2755, %s2763
          %s2765 = smul.addr %s29, 128
          %s2766 = scalar_lea.hbm %s8, %s2765
          %s2768 = sshll.u32 %s2758, 4
          %s2769 = int_to_ptr.vmem [resolvable:$true] %s2768
          %2771 = dma.vmem_to_hbm [thread:$0]  %s2769, 128, %s2766, %s2755
        $region76: #{tpu_custom_call.1} parent=51 // pred_fallthru
          _
      $region52: #{tpu_custom_call.1} parent=5 // pred_fallthru
        _
      %p2772 = scmp.le.s32.totalorder 2, %s24
      // Predicated region
      $region77: #{tpu_custom_call.1} parent=5 // pred_check
        %p2773 = pneg %p2772
      $region78: #{tpu_custom_call.1} parent=5 // pred_check_branch
        %2775 = sbr.rel (%p2773) target = $region80
      $region79: #{tpu_custom_call.1} parent=5 // pred_region
        %s2776 = ssub.s32 %s24, 2
        // Predicated region
        $region81: #{tpu_custom_call.1} parent=79 // pred_check
          %p2777 = pneg %p231
        $region82: #{tpu_custom_call.1} parent=79 // pred_check_branch
          %2779 = sbr.rel (%p2777) target = $region84
        $region83: #{tpu_custom_call.1} parent=79 // pred_region
          %s2780 = sand.u32 %s216, 1
          %s2781 = scalar_lea.sflag [#allocation4], %s2780
          %s2782 = sand.u32 %s216, 1
          %s2783 = smul.addr %s2782, 8
          %s2784 = scalar_lea.vmem [#allocation11], %s2783
          %2785 = dma.done %s2781, 128
        $region84: #{tpu_custom_call.1} parent=79 // pred_fallthru
          _
      $region80: #{tpu_custom_call.1} parent=5 // pred_fallthru
        _
    $region6: #{tpu_custom_call.1} parent=1 // loop_footer
      %s28 = sadd.s32 1, %s24
    $region7: #{tpu_custom_call.1} parent=1 // loop_footer_branch
      %23 = sbr.rel target = $region3
    $region8: #{tpu_custom_call.1} parent=1 // loop_exit
      _
    %2786 = vsyncpa [#allocation3], 1
    %s2787 = scalar_lea.sflag [#allocation3], 1
    %2788 = vsyncpa %s2787, 1
    %2789 = vsyncpa [#allocation6], 1
    %s2790 = scalar_lea.sflag [#allocation6], 1
    %2791 = vsyncpa %s2790, 1
    %2792 = vsyncpa [#allocation9], 1
    %2793 = vsyncpa [#allocation4], 1
    %s2794 = scalar_lea.sflag [#allocation4], 1
    %2795 = vsyncpa %s2794, 1

</llo_original>
